<compile_context>
chip_gen: v5e
topology: v5e:2x2
jax: 0.10.0
libtpu: 0.0.40
codegen_flags: <defaults>
</compile_context>

<pallas_src>
import functools

import jax
import jax.numpy as jnp
from jax import lax
from jax.experimental import pallas as pl
from jax.experimental.pallas import tpu as pltpu


def _round_up(x, m):
    return (x + m - 1) // m * m


def _head_block_mask(hm, m, h, hmp):
    """[HMp, HMp] bool: True iff columns i and j belong to the same head block.

    Built only from iota + compares (exact for any H / M, no vector integer
    division); the static Python loop unrolls over the H-1 head boundaries."""
    row = lax.broadcasted_iota(jnp.int32, (hmp, hmp), 0)
    col = lax.broadcasted_iota(jnp.int32, (hmp, hmp), 1)
    same = (row < hm) & (col < hm)
    for k in range(1, h):                       # static unroll, H is small
        b = k * m
        same = same & ((row < b) == (col < b))
    return same


# ---------------------------------------------------------------------------
# Pass 1: global statistics (reduction over row tiles, 'arbitrary' grid axis).
# ---------------------------------------------------------------------------
def _stats_kernel(q_ref, s_ref, wq_ref, wkv_ref, bq_ref, bkv_ref,
                  kvs_ref, kssum_ref,
                  kvs_acc, sq_acc, sk_acc,
                  *, n_rows, n_padded, tile, hm, m, h, hmp):
    i = pl.program_id(0)

    @pl.when(i == 0)
    def _init():
        kvs_acc[...] = jnp.zeros_like(kvs_acc)
        sq_acc[...] = jnp.zeros_like(sq_acc)
        sk_acc[...] = jnp.zeros_like(sk_acc)
        kssum_ref[...] = jnp.zeros_like(kssum_ref)
        kvs_ref[...] = jnp.zeros_like(kvs_ref)

    # Projections: bf16 MXU operands (each cast exactly once per tile),
    # f32 accumulation, f32 bias add.
    qs = jnp.dot(q_ref[...].astype(jnp.bfloat16), wq_ref[...],
                 preferred_element_type=jnp.float32) + bq_ref[...]       # [T, HMp]
    kv = jnp.dot(s_ref[...].astype(jnp.bfloat16), wkv_ref[...],
                 preferred_element_type=jnp.float32) + bkv_ref[...]      # [T, 2*HMp]
    ks = kv[:, :hmp]                     # lane-aligned slices (HMp % 128 == 0)
    vs = kv[:, hmp:]

    if n_padded != n_rows:               # static: only needed when rows are padded
        rid = i * tile + lax.broadcasted_iota(jnp.int32, (tile, 1), 0)
        valid = (rid < n_rows).astype(jnp.float32)
        qs = qs * valid
        ks = ks * valid
        vs = vs * valid

    sq_acc[...] += jnp.sum(qs * qs)
    sk_acc[...] += jnp.sum(ks * ks)
    kssum_ref[...] += jnp.sum(ks, axis=0, keepdims=True)
    # All heads at once: contract the node axis directly (no transpose
    # materialized); off-diagonal head blocks are dropped at finalize.
    kvs_acc[...] += lax.dot_general(
        ks.astype(jnp.bfloat16), vs.astype(jnp.bfloat16),
        dimension_numbers=(((0,), (0,)), ((), ())),
        preferred_element_type=jnp.float32)

    @pl.when(i == pl.num_programs(0) - 1)
    def _finalize():
        # Global Frobenius norms -> combined scale via EUP rsqrt, folded into the
        # tiny stats instead of rescaling the full [N, HMp] qs / ks.
        scale = lax.rsqrt(sq_acc[...]) * lax.rsqrt(sk_acc[...])          # [1, 1]
        keep = _head_block_mask(hm, m, h, hmp)
        kvs_ref[...] = jnp.where(keep, kvs_acc[...] * scale,
                                 0.0).astype(jnp.bfloat16)
        kssum_ref[...] = kssum_ref[...] * scale


# ---------------------------------------------------------------------------
# Pass 2: per-row-tile output ('parallel' grid axis -> megacore on v7x).
# ---------------------------------------------------------------------------
def _output_kernel(q_ref, s_ref, wq_ref, wv_ref, bq_ref, bv_ref,
                   kvs_ref, kssum_ref, out_ref,
                   *, n_rows, hm, m, h, hmp):
    n_f = jnp.float32(n_rows)

    qs = jnp.dot(q_ref[...].astype(jnp.bfloat16), wq_ref[...],
                 preferred_element_type=jnp.float32) + bq_ref[...]       # [T, HMp]
    vs = jnp.dot(s_ref[...].astype(jnp.bfloat16), wv_ref[...],
                 preferred_element_type=jnp.float32) + bv_ref[...]       # [T, HMp]

    # Numerator: qs @ (masked, norm-scaled) kvs + N * vs.  bf16 MXU operands,
    # f32 accumulation / elementwise.
    num = jnp.dot(qs.astype(jnp.bfloat16), kvs_ref[...],
                  preferred_element_type=jnp.float32) + n_f * vs         # [T, HMp]

    # Normalizer: per-head (q . ks_sum) broadcast over that head's lanes via an
    # exact 0/1 bf16 selector built in-register; + N with no epsilon (as torch).
    sel = _head_block_mask(hm, m, h, hmp).astype(jnp.bfloat16)
    denom = jnp.dot((qs * kssum_ref[...]).astype(jnp.bfloat16), sel,
                    preferred_element_type=jnp.float32) + n_f            # [T, HMp]

    # Divide -> EUP reciprocal (denominator ~ N, well away from zero).
    out_ref[...] = num * pl.reciprocal(denom, approx=True)


# ---------------------------------------------------------------------------
# Wrapper.
# ---------------------------------------------------------------------------
def prepare_params(wq, wk, wv, bq, bk, bv, *, num_heads, out_channels):
    """One-time (per model) preprocessing: pad each Q/K/V section to a 128-lane
    multiple and cast weights to bf16.  Kept out of the per-call hot path."""
    hm = num_heads * out_channels
    hmp = _round_up(hm, 128)
    pad_cols = hmp - hm

    def pad(x):
        return jnp.pad(x, ((0, 0), (0, pad_cols)))

    return {
        "wq": pad(wq).astype(jnp.bfloat16),                                   # [C, HMp]
        "wv": pad(wv).astype(jnp.bfloat16),                                   # [C, HMp]
        "wkv": jnp.concatenate([pad(wk), pad(wv)], 1).astype(jnp.bfloat16),   # [C, 2HMp]
        "bq": pad(bq).astype(jnp.float32),                                    # [1, HMp]
        "bv": pad(bv).astype(jnp.float32),                                    # [1, HMp]
        "bkv": jnp.concatenate([pad(bk), pad(bv)], 1).astype(jnp.float32),    # [1, 2HMp]
    }


@functools.partial(jax.jit, static_argnames=("num_heads", "out_channels", "row_tile"))
def trans_conv_forward(query_input, source_input, params, *,
                       num_heads, out_channels, row_tile=None):
    n, c = query_input.shape
    ns, cs = source_input.shape
    assert n == ns and c == cs, (
        "TransConvLayer.forward requires Nq == Ns (attention_num += N * vs).")
    h, m = num_heads, out_channels
    hm = h * m
    hmp = params["wq"].shape[1]

    # Row tile: large tiles for production N (re-derive per generation — roughly
    # halve on v7x's 64 MiB VMEM); a single 8-row tile at toy sizes.
    if row_tile is None:
        row_tile = 256 if n >= 256 else _round_up(n, 8)
    tile = row_tile
    n_padded = _round_up(n, tile)
    num_tiles = n_padded // tile

    q_pad = jnp.pad(query_input, ((0, n_padded - n), (0, 0)))
    s_pad = jnp.pad(source_input, ((0, n_padded - n), (0, 0)))

    row_spec = pl.BlockSpec((tile, c), lambda i: (i, 0))
    full = lambda shape: pl.BlockSpec(shape, lambda i: (0, 0))

    vmem_limit = 32 * 1024 * 1024   # explicit (> v5e's 16 MiB default, v7x-safe)

    # ---- Pass 1: global statistics ---------------------------------------
    stats = functools.partial(_stats_kernel, n_rows=n, n_padded=n_padded,
                              tile=tile, hm=hm, m=m, h=h, hmp=hmp)
    kvs, kssum = pl.pallas_call(
        stats,
        out_shape=(jax.ShapeDtypeStruct((hmp, hmp), jnp.bfloat16),
                   jax.ShapeDtypeStruct((1, hmp), jnp.float32)),
        grid_spec=pltpu.PrefetchScalarGridSpec(
            num_scalar_prefetch=0,
            grid=(num_tiles,),
            in_specs=[row_spec, row_spec,
                      full((c, hmp)), full((c, 2 * hmp)),
                      full((1, hmp)), full((1, 2 * hmp))],
            out_specs=(full((hmp, hmp)), full((1, hmp))),
            scratch_shapes=[pltpu.VMEM((hmp, hmp), jnp.float32),
                            pltpu.VMEM((1, 1), jnp.float32),
                            pltpu.VMEM((1, 1), jnp.float32)]),
        compiler_params=pltpu.CompilerParams(
            dimension_semantics=("arbitrary",), vmem_limit_bytes=vmem_limit),
    )(q_pad, s_pad, params["wq"], params["wkv"], params["bq"], params["bkv"])

    # ---- Pass 2: row-tiled output (lane-dense [tile, HMp] stores) ---------
    outk = functools.partial(_output_kernel, n_rows=n, hm=hm, m=m, h=h, hmp=hmp)
    attn = pl.pallas_call(
        outk,
        out_shape=jax.ShapeDtypeStruct((n_padded, hmp), jnp.float32),
        grid_spec=pltpu.PrefetchScalarGridSpec(
            num_scalar_prefetch=0,
            grid=(num_tiles,),
            in_specs=[row_spec, row_spec,
                      full((c, hmp)), full((c, hmp)),
                      full((1, hmp)), full((1, hmp)),
                      full((hmp, hmp)), full((1, hmp))],
            out_specs=pl.BlockSpec((tile, hmp), lambda i: (i, 0))),
        compiler_params=pltpu.CompilerParams(
            dimension_semantics=("parallel",), vmem_limit_bytes=vmem_limit),
    )(q_pad, s_pad, params["wq"], params["wv"], params["bq"], params["bv"],
      kvs, kssum)

    # Head mean outside the kernel: the kernel emits the lane-dense pre-mean
    # slab; XLA fuses the cheap slice / reshape / mean.
    return attn[:n, :hm].reshape(n, h, m).mean(axis=1)


# ---------------------------------------------------------------------------
# Pure-JAX reference (mirrors the torch module exactly).
# ---------------------------------------------------------------------------
def _reference(query_input, source_input, wq, wk, wv, bq, bk, bv,
               *, num_heads, out_channels):
    h, m = num_heads, out_channels
    qs = (query_input @ wq + bq).reshape(-1, h, m)
    ks = (source_input @ wk + bk).reshape(-1, h, m)
    vs = (source_input @ wv + bv).reshape(-1, h, m)
    qs = qs / jnp.linalg.norm(qs)
    ks = ks / jnp.linalg.norm(ks)
    n = qs.shape[0]
    kvs = jnp.einsum('lhm,lhd->hmd', ks, vs)
    attention_num = jnp.einsum('nhm,hmd->nhd', qs, kvs) + n * vs
    ks_sum = jnp.einsum('lhm->hm', ks)
    attention_normalizer = jnp.einsum('nhm,hm->nh', qs, ks_sum)[..., None] + n
    attn_output = attention_num / attention_normalizer
    return attn_output.mean(axis=1)


if __name__ == "__main__":
    # Small shapes: N (= num query nodes = num source nodes) = 8,
    # in_channels = 32, out_channels = 8, num_heads = 4.
    N, C, M, H = 8, 32, 8, 4
    HM = H * M

    key = jax.random.PRNGKey(0)
    k_wq, k_wk, k_wv, k_bq, k_bk, k_bv, k_q, k_s = jax.random.split(key, 8)

    # Deterministic nn.Linear-style init: U(-1/sqrt(C), 1/sqrt(C)).
    lim = 1.0 / (C ** 0.5)
    wq = jax.random.uniform(k_wq, (C, HM), jnp.float32, -lim, lim)
    wk = jax.random.uniform(k_wk, (C, HM), jnp.float32, -lim, lim)
    wv = jax.random.uniform(k_wv, (C, HM), jnp.float32, -lim, lim)
    bq = jax.random.uniform(k_bq, (1, HM), jnp.float32, -lim, lim)
    bk = jax.random.uniform(k_bk, (1, HM), jnp.float32, -lim, lim)
    bv = jax.random.uniform(k_bv, (1, HM), jnp.float32, -lim, lim)

    query_input = jax.random.normal(k_q, (N, C), jnp.float32)
    source_input = jax.random.normal(k_s, (N, C), jnp.float32)

    # One-time parameter prep (lane padding + bf16 cast), outside the hot path.
    params = prepare_params(wq, wk, wv, bq, bk, bv, num_heads=H, out_channels=M)

    out = trans_conv_forward(query_input, source_input, params,
                             num_heads=H, out_channels=M)
    out = jax.block_until_ready(out)

    ref = _reference(query_input, source_input, wq, wk, wv, bq, bk, bv,
                     num_heads=H, out_channels=M)
    assert out.shape == (N, M)
    # bf16 MXU operands + approx reciprocal set a ~1e-3 relative error floor.
    assert jnp.allclose(out, ref, rtol=1e-2, atol=1e-2), "kernel/reference mismatch"

    print("KERNEL_OK")
</pallas_src>

<mosaic_0001>
module attributes {stable_mosaic.version = 11 : i64} {
  func.func @_output_kernel(%arg0: i32, %arg1: memref<8x32xf32, #tpu.memory_space<vmem>>, %arg2: memref<8x32xf32, #tpu.memory_space<vmem>>, %arg3: memref<32x128xbf16, #tpu.memory_space<vmem>>, %arg4: memref<32x128xbf16, #tpu.memory_space<vmem>>, %arg5: memref<1x128xf32, #tpu.memory_space<vmem>>, %arg6: memref<1x128xf32, #tpu.memory_space<vmem>>, %arg7: memref<128x128xbf16, #tpu.memory_space<vmem>>, %arg8: memref<1x128xf32, #tpu.memory_space<vmem>>, %arg9: memref<8x128xf32, #tpu.memory_space<vmem>>) attributes {dimension_semantics = [#tpu.dimension_semantics<parallel>], iteration_bounds = array<i64: 1>, scalar_prefetch = 0 : i64, scratch_operands = 0 : i64, tpu.core_type = #tpu.core_type<tc>, window_params = [{transform_indices = @transform_0, window_bounds = array<i64: 8, 32>}, {transform_indices = @transform_1, window_bounds = array<i64: 8, 32>}, {pipeline_mode = #tpu.pipeline_mode<synchronous>, transform_indices = @transform_2, window_bounds = array<i64: 32, 128>}, {pipeline_mode = #tpu.pipeline_mode<synchronous>, transform_indices = @transform_3, window_bounds = array<i64: 32, 128>}, {pipeline_mode = #tpu.pipeline_mode<synchronous>, transform_indices = @transform_4, window_bounds = array<i64: 1, 128>}, {pipeline_mode = #tpu.pipeline_mode<synchronous>, transform_indices = @transform_5, window_bounds = array<i64: 1, 128>}, {pipeline_mode = #tpu.pipeline_mode<synchronous>, transform_indices = @transform_6, window_bounds = array<i64: 128, 128>}, {pipeline_mode = #tpu.pipeline_mode<synchronous>, transform_indices = @transform_7, window_bounds = array<i64: 1, 128>}, {transform_indices = @transform_8, window_bounds = array<i64: 8, 128>}]} {
    %c0 = arith.constant 0 : index
    %c0_0 = arith.constant 0 : index
    %0 = vector.load %arg1[%c0, %c0_0] : memref<8x32xf32, #tpu.memory_space<vmem>>, vector<8x32xf32>
    %1 = arith.truncf %0 : vector<8x32xf32> to vector<8x32xbf16>
    %c0_1 = arith.constant 0 : index
    %c0_2 = arith.constant 0 : index
    %2 = vector.load %arg3[%c0_1, %c0_2] : memref<32x128xbf16, #tpu.memory_space<vmem>>, vector<32x128xbf16>
    %cst = arith.constant dense<0.000000e+00> : vector<8x128xf32>
    %3 = tpu.matmul %1, %2, %cst {dimension_numbers = #tpu.dot_dimension_numbers<[1], [0], [0], [1], [0, 0, 1, 1], [], []>} : vector<8x32xbf16>, vector<32x128xbf16>, vector<8x128xf32> -> vector<8x128xf32>
    %c0_3 = arith.constant 0 : index
    %c0_4 = arith.constant 0 : index
    %4 = vector.load %arg5[%c0_3, %c0_4] : memref<1x128xf32, #tpu.memory_space<vmem>>, vector<1x128xf32>
    %5 = vector.broadcast %4 : vector<1x128xf32> to vector<8x128xf32>
    %6 = arith.addf %3, %5 : vector<8x128xf32>
    %c0_5 = arith.constant 0 : index
    %c0_6 = arith.constant 0 : index
    %7 = vector.load %arg2[%c0_5, %c0_6] : memref<8x32xf32, #tpu.memory_space<vmem>>, vector<8x32xf32>
    %8 = arith.truncf %7 : vector<8x32xf32> to vector<8x32xbf16>
    %c0_7 = arith.constant 0 : index
    %c0_8 = arith.constant 0 : index
    %9 = vector.load %arg4[%c0_7, %c0_8] : memref<32x128xbf16, #tpu.memory_space<vmem>>, vector<32x128xbf16>
    %cst_9 = arith.constant dense<0.000000e+00> : vector<8x128xf32>
    %10 = tpu.matmul %8, %9, %cst_9 {dimension_numbers = #tpu.dot_dimension_numbers<[1], [0], [0], [1], [0, 0, 1, 1], [], []>} : vector<8x32xbf16>, vector<32x128xbf16>, vector<8x128xf32> -> vector<8x128xf32>
    %c0_10 = arith.constant 0 : index
    %c0_11 = arith.constant 0 : index
    %11 = vector.load %arg6[%c0_10, %c0_11] : memref<1x128xf32, #tpu.memory_space<vmem>>, vector<1x128xf32>
    %12 = vector.broadcast %11 : vector<1x128xf32> to vector<8x128xf32>
    %13 = arith.addf %10, %12 : vector<8x128xf32>
    %14 = arith.truncf %6 : vector<8x128xf32> to vector<8x128xbf16>
    %c0_12 = arith.constant 0 : index
    %c0_13 = arith.constant 0 : index
    %15 = vector.load %arg7[%c0_12, %c0_13] : memref<128x128xbf16, #tpu.memory_space<vmem>>, vector<128x128xbf16>
    %cst_14 = arith.constant dense<0.000000e+00> : vector<8x128xf32>
    %16 = tpu.matmul %14, %15, %cst_14 {dimension_numbers = #tpu.dot_dimension_numbers<[1], [0], [0], [1], [0, 0, 1, 1], [], []>} : vector<8x128xbf16>, vector<128x128xbf16>, vector<8x128xf32> -> vector<8x128xf32>
    %cst_15 = arith.constant 8.000000e+00 : f32
    %17 = vector.broadcast %cst_15 : f32 to vector<8x128xf32>
    %18 = arith.mulf %17, %13 : vector<8x128xf32>
    %19 = arith.addf %16, %18 : vector<8x128xf32>
    %20 = tpu.iota {dimensions = array<i32: 0>} : vector<128x128xi32>
    %21 = tpu.iota {dimensions = array<i32: 1>} : vector<128x128xi32>
    %c32_i32 = arith.constant 32 : i32
    %22 = vector.broadcast %c32_i32 : i32 to vector<128x128xi32>
    %23 = arith.cmpi slt, %20, %22 : vector<128x128xi32>
    %c32_i32_16 = arith.constant 32 : i32
    %24 = vector.broadcast %c32_i32_16 : i32 to vector<128x128xi32>
    %25 = arith.cmpi slt, %21, %24 : vector<128x128xi32>
    %26 = arith.andi %23, %25 : vector<128x128xi1>
    %c8_i32 = arith.constant 8 : i32
    %27 = vector.broadcast %c8_i32 : i32 to vector<128x128xi32>
    %28 = arith.cmpi slt, %20, %27 : vector<128x128xi32>
    %c8_i32_17 = arith.constant 8 : i32
    %29 = vector.broadcast %c8_i32_17 : i32 to vector<128x128xi32>
    %30 = arith.cmpi slt, %21, %29 : vector<128x128xi32>
    %31 = arith.xori %28, %30 : vector<128x128xi1>
    %cst_18 = arith.constant dense<true> : vector<128x128xi1>
    %32 = arith.xori %31, %cst_18 : vector<128x128xi1>
    %33 = arith.andi %26, %32 : vector<128x128xi1>
    %c16_i32 = arith.constant 16 : i32
    %34 = vector.broadcast %c16_i32 : i32 to vector<128x128xi32>
    %35 = arith.cmpi slt, %20, %34 : vector<128x128xi32>
    %c16_i32_19 = arith.constant 16 : i32
    %36 = vector.broadcast %c16_i32_19 : i32 to vector<128x128xi32>
    %37 = arith.cmpi slt, %21, %36 : vector<128x128xi32>
    %38 = arith.xori %35, %37 : vector<128x128xi1>
    %cst_20 = arith.constant dense<true> : vector<128x128xi1>
    %39 = arith.xori %38, %cst_20 : vector<128x128xi1>
    %40 = arith.andi %33, %39 : vector<128x128xi1>
    %c24_i32 = arith.constant 24 : i32
    %41 = vector.broadcast %c24_i32 : i32 to vector<128x128xi32>
    %42 = arith.cmpi slt, %20, %41 : vector<128x128xi32>
    %c24_i32_21 = arith.constant 24 : i32
    %43 = vector.broadcast %c24_i32_21 : i32 to vector<128x128xi32>
    %44 = arith.cmpi slt, %21, %43 : vector<128x128xi32>
    %45 = arith.xori %42, %44 : vector<128x128xi1>
    %cst_22 = arith.constant dense<true> : vector<128x128xi1>
    %46 = arith.xori %45, %cst_22 : vector<128x128xi1>
    %47 = arith.andi %40, %46 : vector<128x128xi1>
    %48 = arith.extui %47 : vector<128x128xi1> to vector<128x128xi32>
    %49 = arith.sitofp %48 : vector<128x128xi32> to vector<128x128xf32>
    %50 = arith.truncf %49 : vector<128x128xf32> to vector<128x128xbf16>
    %c0_23 = arith.constant 0 : index
    %c0_24 = arith.constant 0 : index
    %51 = vector.load %arg8[%c0_23, %c0_24] : memref<1x128xf32, #tpu.memory_space<vmem>>, vector<1x128xf32>
    %52 = vector.broadcast %51 : vector<1x128xf32> to vector<8x128xf32>
    %53 = arith.mulf %6, %52 : vector<8x128xf32>
    %54 = arith.truncf %53 : vector<8x128xf32> to vector<8x128xbf16>
    %cst_25 = arith.constant dense<0.000000e+00> : vector<8x128xf32>
    %55 = tpu.matmul %54, %50, %cst_25 {dimension_numbers = #tpu.dot_dimension_numbers<[1], [0], [0], [1], [0, 0, 1, 1], [], []>} : vector<8x128xbf16>, vector<128x128xbf16>, vector<8x128xf32> -> vector<8x128xf32>
    %cst_26 = arith.constant 8.000000e+00 : f32
    %56 = vector.broadcast %cst_26 : f32 to vector<8x128xf32>
    %57 = arith.addf %55, %56 : vector<8x128xf32>
    %58 = tpu.reciprocal %57 {approx = true} : vector<8x128xf32> -> vector<8x128xf32>
    %59 = arith.mulf %19, %58 : vector<8x128xf32>
    %c0_27 = arith.constant 0 : index
    %c0_28 = arith.constant 0 : index
    %60 = vector.load %arg9[%c0_27, %c0_28] : memref<8x128xf32, #tpu.memory_space<vmem>>, vector<8x128xf32>
    tpu.vector_store %arg9[%c0_27, %c0_28], %59 {strides = array<i32>} : memref<8x128xf32, #tpu.memory_space<vmem>>, vector<8x128xf32>,
    return
  }
  func.func @transform_0(%arg0: i32) -> (i32, i32) {
    %c0_i32 = arith.constant 0 : i32
    %c0_i32_0 = arith.constant 0 : i32
    return %arg0, %c0_i32 : i32, i32
  }
  func.func @transform_1(%arg0: i32) -> (i32, i32) {
    %c0_i32 = arith.constant 0 : i32
    %c0_i32_0 = arith.constant 0 : i32
    return %arg0, %c0_i32 : i32, i32
  }
  func.func @transform_2(%arg0: i32) -> (i32, i32) {
    %c0_i32 = arith.constant 0 : i32
    %c0_i32_0 = arith.constant 0 : i32
    %c0_i32_1 = arith.constant 0 : i32
    return %c0_i32, %c0_i32_0 : i32, i32
  }
  func.func @transform_3(%arg0: i32) -> (i32, i32) {
    %c0_i32 = arith.constant 0 : i32
    %c0_i32_0 = arith.constant 0 : i32
    %c0_i32_1 = arith.constant 0 : i32
    return %c0_i32, %c0_i32_0 : i32, i32
  }
  func.func @transform_4(%arg0: i32) -> (i32, i32) {
    %c0_i32 = arith.constant 0 : i32
    %c0_i32_0 = arith.constant 0 : i32
    %c0_i32_1 = arith.constant 0 : i32
    return %c0_i32, %c0_i32_0 : i32, i32
  }
  func.func @transform_5(%arg0: i32) -> (i32, i32) {
    %c0_i32 = arith.constant 0 : i32
    %c0_i32_0 = arith.constant 0 : i32
    %c0_i32_1 = arith.constant 0 : i32
    return %c0_i32, %c0_i32_0 : i32, i32
  }
  func.func @transform_6(%arg0: i32) -> (i32, i32) {
    %c0_i32 = arith.constant 0 : i32
    %c0_i32_0 = arith.constant 0 : i32
    %c0_i32_1 = arith.constant 0 : i32
    return %c0_i32, %c0_i32_0 : i32, i32
  }
  func.func @transform_7(%arg0: i32) -> (i32, i32) {
    %c0_i32 = arith.constant 0 : i32
    %c0_i32_0 = arith.constant 0 : i32
    %c0_i32_1 = arith.constant 0 : i32
    return %c0_i32, %c0_i32_0 : i32, i32
  }
  func.func @transform_8(%arg0: i32) -> (i32, i32) {
    %c0_i32 = arith.constant 0 : i32
    %c0_i32_0 = arith.constant 0 : i32
    return %arg0, %c0_i32 : i32, i32
  }
}

module attributes {stable_mosaic.version = 11 : i64} {
  func.func @_stats_kernel(%arg0: i32, %arg1: memref<8x32xf32, #tpu.memory_space<vmem>>, %arg2: memref<8x32xf32, #tpu.memory_space<vmem>>, %arg3: memref<32x128xbf16, #tpu.memory_space<vmem>>, %arg4: memref<32x256xbf16, #tpu.memory_space<vmem>>, %arg5: memref<1x128xf32, #tpu.memory_space<vmem>>, %arg6: memref<1x256xf32, #tpu.memory_space<vmem>>, %arg7: memref<128x128xbf16, #tpu.memory_space<vmem>>, %arg8: memref<1x128xf32, #tpu.memory_space<vmem>>, %arg9: memref<128x128xf32, #tpu.memory_space<vmem>>, %arg10: memref<1x1xf32, #tpu.memory_space<vmem>>, %arg11: memref<1x1xf32, #tpu.memory_space<vmem>>) attributes {dimension_semantics = [#tpu.dimension_semantics<arbitrary>], iteration_bounds = array<i64: 1>, scalar_prefetch = 0 : i64, scratch_operands = 3 : i64, tpu.core_type = #tpu.core_type<tc>, window_params = [{transform_indices = @transform_0, window_bounds = array<i64: 8, 32>}, {transform_indices = @transform_1, window_bounds = array<i64: 8, 32>}, {pipeline_mode = #tpu.pipeline_mode<synchronous>, transform_indices = @transform_2, window_bounds = array<i64: 32, 128>}, {pipeline_mode = #tpu.pipeline_mode<synchronous>, transform_indices = @transform_3, window_bounds = array<i64: 32, 256>}, {pipeline_mode = #tpu.pipeline_mode<synchronous>, transform_indices = @transform_4, window_bounds = array<i64: 1, 128>}, {pipeline_mode = #tpu.pipeline_mode<synchronous>, transform_indices = @transform_5, window_bounds = array<i64: 1, 256>}, {pipeline_mode = #tpu.pipeline_mode<synchronous>, transform_indices = @transform_6, window_bounds = array<i64: 128, 128>}, {pipeline_mode = #tpu.pipeline_mode<synchronous>, transform_indices = @transform_7, window_bounds = array<i64: 1, 128>}]} {
    %c0_i32 = arith.constant 0 : i32
    %0 = arith.cmpi eq, %arg0, %c0_i32 : i32
    %1 = arith.extui %0 : i1 to i32
    %c0_i32_0 = arith.constant 0 : i32
    %2 = arith.cmpi ne, %1, %c0_i32_0 : i32
    scf.if %2 {
      %cst_35 = arith.constant 0.000000e+00 : f32
      %51 = vector.broadcast %cst_35 : f32 to vector<128x128xf32>
      %c0_36 = arith.constant 0 : index
      %c0_37 = arith.constant 0 : index
      %52 = vector.load %arg9[%c0_36, %c0_37] : memref<128x128xf32, #tpu.memory_space<vmem>>, vector<128x128xf32>
      tpu.vector_store %arg9[%c0_36, %c0_37], %51 {strides = array<i32>} : memref<128x128xf32, #tpu.memory_space<vmem>>, vector<128x128xf32>,
      %cst_38 = arith.constant 0.000000e+00 : f32
      %53 = vector.broadcast %cst_38 : f32 to vector<1x1xf32>
      %c0_39 = arith.constant 0 : index
      %c0_40 = arith.constant 0 : index
      %54 = vector.load %arg10[%c0_39, %c0_40] : memref<1x1xf32, #tpu.memory_space<vmem>>, vector<1x1xf32>
      tpu.vector_store %arg10[%c0_39, %c0_40], %53 {strides = array<i32>} : memref<1x1xf32, #tpu.memory_space<vmem>>, vector<1x1xf32>,
      %cst_41 = arith.constant 0.000000e+00 : f32
      %55 = vector.broadcast %cst_41 : f32 to vector<1x1xf32>
      %c0_42 = arith.constant 0 : index
      %c0_43 = arith.constant 0 : index
      %56 = vector.load %arg11[%c0_42, %c0_43] : memref<1x1xf32, #tpu.memory_space<vmem>>, vector<1x1xf32>
      tpu.vector_store %arg11[%c0_42, %c0_43], %55 {strides = array<i32>} : memref<1x1xf32, #tpu.memory_space<vmem>>, vector<1x1xf32>,
      %cst_44 = arith.constant 0.000000e+00 : f32
      %57 = vector.broadcast %cst_44 : f32 to vector<1x128xf32>
      %c0_45 = arith.constant 0 : index
      %c0_46 = arith.constant 0 : index
      %58 = vector.load %arg8[%c0_45, %c0_46] : memref<1x128xf32, #tpu.memory_space<vmem>>, vector<1x128xf32>
      tpu.vector_store %arg8[%c0_45, %c0_46], %57 {strides = array<i32>} : memref<1x128xf32, #tpu.memory_space<vmem>>, vector<1x128xf32>,
      %cst_47 = arith.constant 0.000000e+00 : bf16
      %59 = vector.broadcast %cst_47 : bf16 to vector<128x128xbf16>
      %c0_48 = arith.constant 0 : index
      %c0_49 = arith.constant 0 : index
      %60 = vector.load %arg7[%c0_48, %c0_49] : memref<128x128xbf16, #tpu.memory_space<vmem>>, vector<128x128xbf16>
      tpu.vector_store %arg7[%c0_48, %c0_49], %59 {strides = array<i32>} : memref<128x128xbf16, #tpu.memory_space<vmem>>, vector<128x128xbf16>,
    } else {
    }
    %c0 = arith.constant 0 : index
    %c0_1 = arith.constant 0 : index
    %3 = vector.load %arg1[%c0, %c0_1] : memref<8x32xf32, #tpu.memory_space<vmem>>, vector<8x32xf32>
    %4 = arith.truncf %3 : vector<8x32xf32> to vector<8x32xbf16>
    %c0_2 = arith.constant 0 : index
    %c0_3 = arith.constant 0 : index
    %5 = vector.load %arg3[%c0_2, %c0_3] : memref<32x128xbf16, #tpu.memory_space<vmem>>, vector<32x128xbf16>
    %cst = arith.constant dense<0.000000e+00> : vector<8x128xf32>
    %6 = tpu.matmul %4, %5, %cst {dimension_numbers = #tpu.dot_dimension_numbers<[1], [0], [0], [1], [0, 0, 1, 1], [], []>} : vector<8x32xbf16>, vector<32x128xbf16>, vector<8x128xf32> -> vector<8x128xf32>
    %c0_4 = arith.constant 0 : index
    %c0_5 = arith.constant 0 : index
    %7 = vector.load %arg5[%c0_4, %c0_5] : memref<1x128xf32, #tpu.memory_space<vmem>>, vector<1x128xf32>
    %8 = vector.broadcast %7 : vector<1x128xf32> to vector<8x128xf32>
    %9 = arith.addf %6, %8 : vector<8x128xf32>
    %c0_6 = arith.constant 0 : index
    %c0_7 = arith.constant 0 : index
    %10 = vector.load %arg2[%c0_6, %c0_7] : memref<8x32xf32, #tpu.memory_space<vmem>>, vector<8x32xf32>
    %11 = arith.truncf %10 : vector<8x32xf32> to vector<8x32xbf16>
    %c0_8 = arith.constant 0 : index
    %c0_9 = arith.constant 0 : index
    %12 = vector.load %arg4[%c0_8, %c0_9] : memref<32x256xbf16, #tpu.memory_space<vmem>>, vector<32x256xbf16>
    %cst_10 = arith.constant dense<0.000000e+00> : vector<8x256xf32>
    %13 = tpu.matmul %11, %12, %cst_10 {dimension_numbers = #tpu.dot_dimension_numbers<[1], [0], [0], [1], [0, 0, 1, 1], [], []>} : vector<8x32xbf16>, vector<32x256xbf16>, vector<8x256xf32> -> vector<8x256xf32>
    %c0_11 = arith.constant 0 : index
    %c0_12 = arith.constant 0 : index
    %14 = vector.load %arg6[%c0_11, %c0_12] : memref<1x256xf32, #tpu.memory_space<vmem>>, vector<1x256xf32>
    %15 = vector.broadcast %14 : vector<1x256xf32> to vector<8x256xf32>
    %16 = arith.addf %13, %15 : vector<8x256xf32>
    %17 = vector.extract_strided_slice %16 {offsets = [0, 0], sizes = [8, 128], strides = [1, 1]} : vector<8x256xf32> to vector<8x128xf32>
    %18 = vector.extract_strided_slice %16 {offsets = [0, 128], sizes = [8, 128], strides = [1, 1]} : vector<8x256xf32> to vector<8x128xf32>
    %c0_13 = arith.constant 0 : index
    %c0_14 = arith.constant 0 : index
    %19 = vector.load %arg10[%c0_13, %c0_14] : memref<1x1xf32, #tpu.memory_space<vmem>>, vector<1x1xf32>
    %20 = arith.mulf %9, %9 : vector<8x128xf32>
    %21 = vector.shape_cast %20 : vector<8x128xf32> to vector<1x8x128xf32>
    %cst_15 = arith.constant dense<0.000000e+00> : vector<1xf32>
    %22 = vector.multi_reduction <add>, %21, %cst_15 [1, 2] : vector<1x8x128xf32> to vector<1xf32>
    %23 = vector.shape_cast %22 : vector<1xf32> to vector<1x1x1xf32>
    %24 = vector.extract %23[0, 0, 0] : f32 from vector<1x1x1xf32>
    %25 = vector.broadcast %24 : f32 to vector<1x1xf32>
    %26 = arith.addf %19, %25 : vector<1x1xf32>
    %c0_16 = arith.constant 0 : index
    %c0_17 = arith.constant 0 : index
    %27 = vector.load %arg10[%c0_16, %c0_17] : memref<1x1xf32, #tpu.memory_space<vmem>>, vector<1x1xf32>
    tpu.vector_store %arg10[%c0_16, %c0_17], %26 {strides = array<i32>} : memref<1x1xf32, #tpu.memory_space<vmem>>, vector<1x1xf32>,
    %c0_18 = arith.constant 0 : index
    %c0_19 = arith.constant 0 : index
    %28 = vector.load %arg11[%c0_18, %c0_19] : memref<1x1xf32, #tpu.memory_space<vmem>>, vector<1x1xf32>
    %29 = arith.mulf %17, %17 : vector<8x128xf32>
    %30 = vector.shape_cast %29 : vector<8x128xf32> to vector<1x8x128xf32>
    %cst_20 = arith.constant dense<0.000000e+00> : vector<1xf32>
    %31 = vector.multi_reduction <add>, %30, %cst_20 [1, 2] : vector<1x8x128xf32> to vector<1xf32>
    %32 = vector.shape_cast %31 : vector<1xf32> to vector<1x1x1xf32>
    %33 = vector.extract %32[0, 0, 0] : f32 from vector<1x1x1xf32>
    %34 = vector.broadcast %33 : f32 to vector<1x1xf32>
    %35 = arith.addf %28, %34 : vector<1x1xf32>
    %c0_21 = arith.constant 0 : index
    %c0_22 = arith.constant 0 : index
    %36 = vector.load %arg11[%c0_21, %c0_22] : memref<1x1xf32, #tpu.memory_space<vmem>>, vector<1x1xf32>
    tpu.vector_store %arg11[%c0_21, %c0_22], %35 {strides = array<i32>} : memref<1x1xf32, #tpu.memory_space<vmem>>, vector<1x1xf32>,
    %c0_23 = arith.constant 0 : index
    %c0_24 = arith.constant 0 : index
    %37 = vector.load %arg8[%c0_23, %c0_24] : memref<1x128xf32, #tpu.memory_space<vmem>>, vector<1x128xf32>
    %cst_25 = arith.constant dense<0.000000e+00> : vector<128xf32>
    %38 = vector.multi_reduction <add>, %17, %cst_25 [0] : vector<8x128xf32> to vector<128xf32>
    %39 = vector.shape_cast %38 : vector<128xf32> to vector<1x128xf32>
    %40 = arith.addf %37, %39 : vector<1x128xf32>
    %c0_26 = arith.constant 0 : index
    %c0_27 = arith.constant 0 : index
    %41 = vector.load %arg8[%c0_26, %c0_27] : memref<1x128xf32, #tpu.memory_space<vmem>>, vector<1x128xf32>
    tpu.vector_store %arg8[%c0_26, %c0_27], %40 {strides = array<i32>} : memref<1x128xf32, #tpu.memory_space<vmem>>, vector<1x128xf32>,
    %c0_28 = arith.constant 0 : index
    %c0_29 = arith.constant 0 : index
    %42 = vector.load %arg9[%c0_28, %c0_29] : memref<128x128xf32, #tpu.memory_space<vmem>>, vector<128x128xf32>
    %43 = arith.truncf %17 : vector<8x128xf32> to vector<8x128xbf16>
    %44 = arith.truncf %18 : vector<8x128xf32> to vector<8x128xbf16>
    %cst_30 = arith.constant dense<0.000000e+00> : vector<128x128xf32>
    %45 = tpu.matmul %43, %44, %cst_30 {dimension_numbers = #tpu.dot_dimension_numbers<[0], [0], [1], [1], [0, 1, 1, 1], [], []>} : vector<8x128xbf16>, vector<8x128xbf16>, vector<128x128xf32> -> vector<128x128xf32>
    %46 = arith.addf %42, %45 : vector<128x128xf32>
    %c0_31 = arith.constant 0 : index
    %c0_32 = arith.constant 0 : index
    %47 = vector.load %arg9[%c0_31, %c0_32] : memref<128x128xf32, #tpu.memory_space<vmem>>, vector<128x128xf32>
    tpu.vector_store %arg9[%c0_31, %c0_32], %46 {strides = array<i32>} : memref<128x128xf32, #tpu.memory_space<vmem>>, vector<128x128xf32>,
    %c0_i32_33 = arith.constant 0 : i32
    %48 = arith.cmpi eq, %arg0, %c0_i32_33 : i32
    %49 = arith.extui %48 : i1 to i32
    %c0_i32_34 = arith.constant 0 : i32
    %50 = arith.cmpi ne, %49, %c0_i32_34 : i32
    scf.if %50 {
      %c0_35 = arith.constant 0 : index
      %c0_36 = arith.constant 0 : index
      %51 = vector.load %arg10[%c0_35, %c0_36] : memref<1x1xf32, #tpu.memory_space<vmem>>, vector<1x1xf32>
      %52 = math.rsqrt %51 : vector<1x1xf32>
      %c0_37 = arith.constant 0 : index
      %c0_38 = arith.constant 0 : index
      %53 = vector.load %arg11[%c0_37, %c0_38] : memref<1x1xf32, #tpu.memory_space<vmem>>, vector<1x1xf32>
      %54 = math.rsqrt %53 : vector<1x1xf32>
      %55 = arith.mulf %52, %54 : vector<1x1xf32>
      %56 = tpu.iota {dimensions = array<i32: 0>} : vector<128x128xi32>
      %57 = tpu.iota {dimensions = array<i32: 1>} : vector<128x128xi32>
      %c32_i32 = arith.constant 32 : i32
      %58 = vector.broadcast %c32_i32 : i32 to vector<128x128xi32>
      %59 = arith.cmpi slt, %56, %58 : vector<128x128xi32>
      %c32_i32_39 = arith.constant 32 : i32
      %60 = vector.broadcast %c32_i32_39 : i32 to vector<128x128xi32>
      %61 = arith.cmpi slt, %57, %60 : vector<128x128xi32>
      %62 = arith.andi %59, %61 : vector<128x128xi1>
      %c8_i32 = arith.constant 8 : i32
      %63 = vector.broadcast %c8_i32 : i32 to vector<128x128xi32>
      %64 = arith.cmpi slt, %56, %63 : vector<128x128xi32>
      %c8_i32_40 = arith.constant 8 : i32
      %65 = vector.broadcast %c8_i32_40 : i32 to vector<128x128xi32>
      %66 = arith.cmpi slt, %57, %65 : vector<128x128xi32>
      %67 = arith.xori %64, %66 : vector<128x128xi1>
      %cst_41 = arith.constant dense<true> : vector<128x128xi1>
      %68 = arith.xori %67, %cst_41 : vector<128x128xi1>
      %69 = arith.andi %62, %68 : vector<128x128xi1>
      %c16_i32 = arith.constant 16 : i32
      %70 = vector.broadcast %c16_i32 : i32 to vector<128x128xi32>
      %71 = arith.cmpi slt, %56, %70 : vector<128x128xi32>
      %c16_i32_42 = arith.constant 16 : i32
      %72 = vector.broadcast %c16_i32_42 : i32 to vector<128x128xi32>
      %73 = arith.cmpi slt, %57, %72 : vector<128x128xi32>
      %74 = arith.xori %71, %73 : vector<128x128xi1>
      %cst_43 = arith.constant dense<true> : vector<128x128xi1>
      %75 = arith.xori %74, %cst_43 : vector<128x128xi1>
      %76 = arith.andi %69, %75 : vector<128x128xi1>
      %c24_i32 = arith.constant 24 : i32
      %77 = vector.broadcast %c24_i32 : i32 to vector<128x128xi32>
      %78 = arith.cmpi slt, %56, %77 : vector<128x128xi32>
      %c24_i32_44 = arith.constant 24 : i32
      %79 = vector.broadcast %c24_i32_44 : i32 to vector<128x128xi32>
      %80 = arith.cmpi slt, %57, %79 : vector<128x128xi32>
      %81 = arith.xori %78, %80 : vector<128x128xi1>
      %cst_45 = arith.constant dense<true> : vector<128x128xi1>
      %82 = arith.xori %81, %cst_45 : vector<128x128xi1>
      %83 = arith.andi %76, %82 : vector<128x128xi1>
      %c0_46 = arith.constant 0 : index
      %c0_47 = arith.constant 0 : index
      %84 = vector.load %arg9[%c0_46, %c0_47] : memref<128x128xf32, #tpu.memory_space<vmem>>, vector<128x128xf32>
      %85 = vector.broadcast %55 : vector<1x1xf32> to vector<128x128xf32>
      %86 = arith.mulf %84, %85 : vector<128x128xf32>
      %cst_48 = arith.constant 0.000000e+00 : f32
      %87 = vector.broadcast %cst_48 : f32 to vector<128x128xf32>
      %88 = arith.select %83, %86, %87 : vector<128x128xi1>, vector<128x128xf32>
      %89 = arith.truncf %88 : vector<128x128xf32> to vector<128x128xbf16>
      %c0_49 = arith.constant 0 : index
      %c0_50 = arith.constant 0 : index
      %90 = vector.load %arg7[%c0_49, %c0_50] : memref<128x128xbf16, #tpu.memory_space<vmem>>, vector<128x128xbf16>
      tpu.vector_store %arg7[%c0_49, %c0_50], %89 {strides = array<i32>} : memref<128x128xbf16, #tpu.memory_space<vmem>>, vector<128x128xbf16>,
      %c0_51 = arith.constant 0 : index
      %c0_52 = arith.constant 0 : index
      %91 = vector.load %arg8[%c0_51, %c0_52] : memref<1x128xf32, #tpu.memory_space<vmem>>, vector<1x128xf32>
      %92 = vector.broadcast %55 : vector<1x1xf32> to vector<1x128xf32>
      %93 = arith.mulf %91, %92 : vector<1x128xf32>
      %c0_53 = arith.constant 0 : index
      %c0_54 = arith.constant 0 : index
      %94 = vector.load %arg8[%c0_53, %c0_54] : memref<1x128xf32, #tpu.memory_space<vmem>>, vector<1x128xf32>
      tpu.vector_store %arg8[%c0_53, %c0_54], %93 {strides = array<i32>} : memref<1x128xf32, #tpu.memory_space<vmem>>, vector<1x128xf32>,
    } else {
    }
    return
  }
  func.func @transform_0(%arg0: i32) -> (i32, i32) {
    %c0_i32 = arith.constant 0 : i32
    %c0_i32_0 = arith.constant 0 : i32
    return %arg0, %c0_i32 : i32, i32
  }
  func.func @transform_1(%arg0: i32) -> (i32, i32) {
    %c0_i32 = arith.constant 0 : i32
    %c0_i32_0 = arith.constant 0 : i32
    return %arg0, %c0_i32 : i32, i32
  }
  func.func @transform_2(%arg0: i32) -> (i32, i32) {
    %c0_i32 = arith.constant 0 : i32
    %c0_i32_0 = arith.constant 0 : i32
    %c0_i32_1 = arith.constant 0 : i32
    return %c0_i32, %c0_i32_0 : i32, i32
  }
  func.func @transform_3(%arg0: i32) -> (i32, i32) {
    %c0_i32 = arith.constant 0 : i32
    %c0_i32_0 = arith.constant 0 : i32
    %c0_i32_1 = arith.constant 0 : i32
    return %c0_i32, %c0_i32_0 : i32, i32
  }
  func.func @transform_4(%arg0: i32) -> (i32, i32) {
    %c0_i32 = arith.constant 0 : i32
    %c0_i32_0 = arith.constant 0 : i32
    %c0_i32_1 = arith.constant 0 : i32
    return %c0_i32, %c0_i32_0 : i32, i32
  }
  func.func @transform_5(%arg0: i32) -> (i32, i32) {
    %c0_i32 = arith.constant 0 : i32
    %c0_i32_0 = arith.constant 0 : i32
    %c0_i32_1 = arith.constant 0 : i32
    return %c0_i32, %c0_i32_0 : i32, i32
  }
  func.func @transform_6(%arg0: i32) -> (i32, i32) {
    %c0_i32 = arith.constant 0 : i32
    %c0_i32_0 = arith.constant 0 : i32
    %c0_i32_1 = arith.constant 0 : i32
    return %c0_i32, %c0_i32_0 : i32, i32
  }
  func.func @transform_7(%arg0: i32) -> (i32, i32) {
    %c0_i32 = arith.constant 0 : i32
    %c0_i32_0 = arith.constant 0 : i32
    %c0_i32_1 = arith.constant 0 : i32
    return %c0_i32, %c0_i32_0 : i32, i32
  }
}

</mosaic_0001>

<llo_original>
// kernel: trans_conv_forward.3
$region0: #{trans_conv_forward.3}
  #allocation0 [shape = 'u32[]', space=smem, size = 0x4, offset = 0x4, fixed_abs, tag = 'smem constant byte address 0x4 - core index']
  #allocation1 [shape = 'u32[72,128]{1,0:T(1,128)}', space=vmem, size = 0x9000, scoped, tag = 'internal scratch']
  %s0 = inlined_call_operand.hbm [shape: f32[8,32], index: 0, kind: input, shape index: {}]
  %s1 = inlined_call_operand.hbm [shape: f32[8,32], index: 1, kind: input, shape index: {}]
  %s2 = inlined_call_operand.hbm [shape: bf16[32,128], index: 2, kind: input, shape index: {}]
  %s3 = inlined_call_operand.hbm [shape: bf16[32,128], index: 3, kind: input, shape index: {}]
  %s4 = inlined_call_operand.vmem [shape: f32[1,128], index: 4, kind: input, shape index: {}]
  %s5 = inlined_call_operand.vmem [shape: f32[1,128], index: 5, kind: input, shape index: {}]
  %s6 = inlined_call_operand.vmem [shape: bf16[128,128], index: 6, kind: input, shape index: {}]
  %s7 = inlined_call_operand.vmem [shape: f32[1,128], index: 7, kind: input, shape index: {}]
  %s8 = inlined_call_operand.vmem [shape: f32[8,128], index: 8, kind: output, shape index: {}]
  %s9 = sld [smem:[#allocation0]]
  $region58: #{trans_conv_forward.3} parent=0
    _
  %s11 = ssub.s32 1, %s9
  %s12 = scalar_select 0, %s11, %s9
  $region1: #{trans_conv_forward.3} parent=0
    #allocation2 [shape = 'u8[4096]{0}', space=vmem, size = 0x1000, scoped, tag = 'input window, operand 0, single buffered']
    #allocation3 [shape = 's32[1]{0}', space=sflag, size = 0x4, scoped, tag = 'scoped memory for trans_conv_forward.3']
    #allocation4 [shape = 'u8[4096]{0}', space=vmem, size = 0x1000, scoped, tag = 'input window, operand 1, single buffered']
    #allocation5 [shape = 's32[1]{0}', space=sflag, size = 0x4, scoped, tag = 'scoped memory for trans_conv_forward.3']
    #allocation6 [shape = 'u8[8192]{0}', space=vmem, size = 0x2000, scoped, tag = 'input window, operand 2, single buffered']
    #allocation7 [shape = 'u8[8192]{0}', space=vmem, size = 0x2000, scoped, tag = 'input window, operand 3, single buffered']
    #allocation8 [shape = 's32[1]{0}', space=sflag, size = 0x4, scoped, tag = 'scoped memory for trans_conv_forward.3']
    %13 = vsyncpa [#allocation3], 0
    %14 = vsyncpa [#allocation5], 0
    %15 = vsyncpa [#allocation8], 0
    // Predicated region
    $region2: #{trans_conv_forward.3} parent=1 // pred_check
      _
    $region3: #{trans_conv_forward.3} parent=1 // pred_check_branch
      %17 = sbr.rel (0) target = $region5
    $region4: #{trans_conv_forward.3} parent=1 // pred_region
      %19 = vsyncadd [#allocation3], 0
      %s21 = sshll.u32 %s0, 4
      %s22 = int_to_ptr.hbm [resolvable:$true] %s21
      %s23 = sshll.u32 [#allocation2], 4
      %s24 = int_to_ptr.vmem [resolvable:$true] %s23
      %26 = dma.hbm_to_vmem [thread:$0]  %s22, 128, %s24, [#allocation3]
    $region5: #{trans_conv_forward.3} parent=1 // pred_fallthru
      _
    // Predicated region
    $region6: #{trans_conv_forward.3} parent=1 // pred_check
      _
    $region7: #{trans_conv_forward.3} parent=1 // pred_check_branch
      %28 = sbr.rel (0) target = $region9
    $region8: #{trans_conv_forward.3} parent=1 // pred_region
      %30 = vsyncadd [#allocation5], 0
      %s32 = sshll.u32 %s1, 4
      %s33 = int_to_ptr.hbm [resolvable:$true] %s32
      %s34 = sshll.u32 [#allocation4], 4
      %s35 = int_to_ptr.vmem [resolvable:$true] %s34
      %37 = dma.hbm_to_vmem [thread:$0]  %s33, 128, %s35, [#allocation5]
    $region9: #{trans_conv_forward.3} parent=1 // pred_fallthru
      _
    // Predicated region
    $region10: #{trans_conv_forward.3} parent=1 // pred_check
      _
    $region11: #{trans_conv_forward.3} parent=1 // pred_check_branch
      %39 = sbr.rel (0) target = $region13
    $region12: #{trans_conv_forward.3} parent=1 // pred_region
      %41 = vsyncadd [#allocation5], 0
      %s42 = sshll.u32 %s2, 4
      %s43 = int_to_ptr.hbm [resolvable:$true] %s42
      %s44 = sshll.u32 [#allocation6], 4
      %s45 = int_to_ptr.vmem [resolvable:$true] %s44
      %50 = dma.hbm_to_vmem [thread:$0]  %s43, 256, %s45, [#allocation5], 64, 64, 4
    $region13: #{trans_conv_forward.3} parent=1 // pred_fallthru
      _
    // Predicated region
    $region14: #{trans_conv_forward.3} parent=1 // pred_check
      _
    $region15: #{trans_conv_forward.3} parent=1 // pred_check_branch
      %52 = sbr.rel (0) target = $region17
    $region16: #{trans_conv_forward.3} parent=1 // pred_region
      %54 = vsyncadd [#allocation8], 0
      %s55 = sshll.u32 %s3, 4
      %s56 = int_to_ptr.hbm [resolvable:$true] %s55
      %s57 = sshll.u32 [#allocation7], 4
      %s58 = int_to_ptr.vmem [resolvable:$true] %s57
      %63 = dma.hbm_to_vmem [thread:$0]  %s56, 256, %s58, [#allocation8], 64, 64, 4
    $region17: #{trans_conv_forward.3} parent=1 // pred_fallthru
      _
    // Predicated region
    $region18: #{trans_conv_forward.3} parent=1 // pred_check
      _
    $region19: #{trans_conv_forward.3} parent=1 // pred_check_branch
      %65 = sbr.rel (0) target = $region21
    $region20: #{trans_conv_forward.3} parent=1 // pred_region
      _
    $region21: #{trans_conv_forward.3} parent=1 // pred_fallthru
      _
    // Predicated region
    $region22: #{trans_conv_forward.3} parent=1 // pred_check
      _
    $region23: #{trans_conv_forward.3} parent=1 // pred_check_branch
      %67 = sbr.rel (0) target = $region25
    $region24: #{trans_conv_forward.3} parent=1 // pred_region
      _
    $region25: #{trans_conv_forward.3} parent=1 // pred_fallthru
      _
    // Predicated region
    $region26: #{trans_conv_forward.3} parent=1 // pred_check
      _
    $region27: #{trans_conv_forward.3} parent=1 // pred_check_branch
      %69 = sbr.rel (0) target = $region29
    $region28: #{trans_conv_forward.3} parent=1 // pred_region
      _
    $region29: #{trans_conv_forward.3} parent=1 // pred_fallthru
      _
    // Predicated region
    $region30: #{trans_conv_forward.3} parent=1 // pred_check
      _
    $region31: #{trans_conv_forward.3} parent=1 // pred_check_branch
      %71 = sbr.rel (0) target = $region33
    $region32: #{trans_conv_forward.3} parent=1 // pred_region
      _
    $region33: #{trans_conv_forward.3} parent=1 // pred_fallthru
      _
    // Predicated region
    $region34: #{trans_conv_forward.3} parent=1 // pred_check
      _
    $region35: #{trans_conv_forward.3} parent=1 // pred_check_branch
      %73 = sbr.rel (0) target = $region37
    $region36: #{trans_conv_forward.3} parent=1 // pred_region
      %75 = dma.done [#allocation3], 128
    $region37: #{trans_conv_forward.3} parent=1 // pred_fallthru
      _
    // Predicated region
    $region38: #{trans_conv_forward.3} parent=1 // pred_check
      _
    $region39: #{trans_conv_forward.3} parent=1 // pred_check_branch
      %77 = sbr.rel (0) target = $region41
    $region40: #{trans_conv_forward.3} parent=1 // pred_region
      %79 = dma.done [#allocation5], 128
    $region41: #{trans_conv_forward.3} parent=1 // pred_fallthru
      _
    // Predicated region
    $region42: #{trans_conv_forward.3} parent=1 // pred_check
      _
    $region43: #{trans_conv_forward.3} parent=1 // pred_check_branch
      %81 = sbr.rel (0) target = $region45
    $region44: #{trans_conv_forward.3} parent=1 // pred_region
      %83 = dma.done [#allocation5], 256
    $region45: #{trans_conv_forward.3} parent=1 // pred_fallthru
      _
    // Predicated region
    $region46: #{trans_conv_forward.3} parent=1 // pred_check
      _
    $region47: #{trans_conv_forward.3} parent=1 // pred_check_branch
      %85 = sbr.rel (0) target = $region49
    $region48: #{trans_conv_forward.3} parent=1 // pred_region
      %87 = dma.done [#allocation8], 256
    $region49: #{trans_conv_forward.3} parent=1 // pred_fallthru
      _
    %v89 = vld [vmem:[#allocation2] sm:$0xff]
    %v90 = vpack.c.bf16 %v89, %v89
    %v91 = vld [vmem:[#allocation6] sm:$0xf]
    %v92 = vld [vmem:[#allocation6 + $0x4] sm:$0xf]
    %v93 = vld [vmem:[#allocation6 + $0x8] sm:$0xf]
    %v94 = vld [vmem:[#allocation6 + $0xc] sm:$0xf]
    %v95 = vld [vmem:[%s4] sm:$0x1]
    %v97 = vperm.slane %v95, 0
    %v103 = vunpack.c.l.b16 %v91
    %v104 = vunpack.c.l.b16 %v92
    %v105 = vunpack.c.l.b16 %v93
    %v106 = vunpack.c.l.b16 %v94
    %v107 = vpack.c.b16 %v104, %v103
    %v108 = vpack.c.b16 %v106, %v105
    %vm111 = vcmask 261120
    %v113 = vsel %vm111, %v90, 0
    %115 = vmatpush.bf16.msra.mxu0 0
    %116 = vmatpush.bf16.msra.mxu0 0
    %117 = vmatpush.bf16.msra.mxu0 0
    %118 = vmatpush.bf16.msra.mxu0 0
    %119 = vmatpush.bf16.msra.mxu0 0
    %120 = vmatpush.bf16.msra.mxu0 0
    %121 = vmatpush.bf16.msra.mxu0 %v108
    %122 = vmatpush.bf16.msra.mxu0 %v107
    %123 = vmatmul.bf16.gmra.mxu0 %v113
    %v124 = vpop.f32.mrf.mxu0
    %v125 = vadd.f32 %v97, %v124
    %v126 = vpop.f32.mrf.mxu0
    %127 = vdwg.mxu0
    %v128 = vld [vmem:[#allocation4] sm:$0xff]
    %v129 = vpack.c.bf16 %v128, %v128
    %v130 = vld [vmem:[#allocation7] sm:$0xf]
    %v131 = vld [vmem:[#allocation7 + $0x4] sm:$0xf]
    %v132 = vld [vmem:[#allocation7 + $0x8] sm:$0xf]
    %v133 = vld [vmem:[#allocation7 + $0xc] sm:$0xf]
    %v134 = vld [vmem:[%s5] sm:$0x1]
    %v136 = vperm.slane %v134, 0
    %v142 = vunpack.c.l.b16 %v130
    %v143 = vunpack.c.l.b16 %v131
    %v144 = vunpack.c.l.b16 %v132
    %v145 = vunpack.c.l.b16 %v133
    %v146 = vpack.c.b16 %v143, %v142
    %v147 = vpack.c.b16 %v145, %v144
    %v151 = vsel %vm111, %v129, 0
    %153 = vmatpush.bf16.msra.mxu0 0
    %154 = vmatpush.bf16.msra.mxu0 0
    %155 = vmatpush.bf16.msra.mxu0 0
    %156 = vmatpush.bf16.msra.mxu0 0
    %157 = vmatpush.bf16.msra.mxu0 0
    %158 = vmatpush.bf16.msra.mxu0 0
    %159 = vmatpush.bf16.msra.mxu0 %v147
    %160 = vmatpush.bf16.msra.mxu0 %v146
    %161 = vmatmul.bf16.gmra.mxu0 %v151
    %v162 = vpop.f32.mrf.mxu0
    %v163 = vadd.f32 %v136, %v162
    %v164 = vpop.f32.mrf.mxu0
    %165 = vdwg.mxu0
    %v166 = vpack.c.bf16 %v125, %v125
    %v167 = vld [vmem:[%s6] sm:$0xf]
    %v168 = vld [vmem:[%s6 + $0x4] sm:$0xf]
    %v169 = vld [vmem:[%s6 + $0x8] sm:$0xf]
    %v170 = vld [vmem:[%s6 + $0xc] sm:$0xf]
    %v171 = vld [vmem:[%s6 + $0x10] sm:$0xf]
    %v172 = vld [vmem:[%s6 + $0x14] sm:$0xf]
    %v173 = vld [vmem:[%s6 + $0x18] sm:$0xf]
    %v174 = vld [vmem:[%s6 + $0x1c] sm:$0xf]
    %v175 = vld [vmem:[%s6 + $0x20] sm:$0xf]
    %v176 = vld [vmem:[%s6 + $0x24] sm:$0xf]
    %v177 = vld [vmem:[%s6 + $0x28] sm:$0xf]
    %v178 = vld [vmem:[%s6 + $0x2c] sm:$0xf]
    %v179 = vld [vmem:[%s6 + $0x30] sm:$0xf]
    %v180 = vld [vmem:[%s6 + $0x34] sm:$0xf]
    %v181 = vld [vmem:[%s6 + $0x38] sm:$0xf]
    %v182 = vld [vmem:[%s6 + $0x3c] sm:$0xf]
    %v183 = vmul.f32 %v163, 8.0
    %v200 = vunpack.c.l.b16 %v167
    %v201 = vunpack.c.l.b16 %v168
    %v202 = vunpack.c.l.b16 %v169
    %v203 = vunpack.c.l.b16 %v170
    %v204 = vunpack.c.l.b16 %v171
    %v205 = vunpack.c.l.b16 %v172
    %v206 = vunpack.c.l.b16 %v173
    %v207 = vunpack.c.l.b16 %v174
    %v208 = vunpack.c.l.b16 %v175
    %v209 = vunpack.c.l.b16 %v176
    %v210 = vunpack.c.l.b16 %v177
    %v211 = vunpack.c.l.b16 %v178
    %v212 = vunpack.c.l.b16 %v179
    %v213 = vunpack.c.l.b16 %v180
    %v214 = vunpack.c.l.b16 %v181
    %v215 = vunpack.c.l.b16 %v182
    %v216 = vpack.c.b16 %v201, %v200
    %v217 = vpack.c.b16 %v203, %v202
    %v218 = vpack.c.b16 %v205, %v204
    %v219 = vpack.c.b16 %v207, %v206
    %v220 = vpack.c.b16 %v209, %v208
    %v221 = vpack.c.b16 %v211, %v210
    %v222 = vpack.c.b16 %v213, %v212
    %v223 = vpack.c.b16 %v215, %v214
    %232 = vmatpush.bf16.msra.mxu0 %v223
    %233 = vmatpush.bf16.msra.mxu0 %v222
    %234 = vmatpush.bf16.msra.mxu0 %v221
    %235 = vmatpush.bf16.msra.mxu0 %v220
    %236 = vmatpush.bf16.msra.mxu0 %v219
    %237 = vmatpush.bf16.msra.mxu0 %v218
    %238 = vmatpush.bf16.msra.mxu0 %v217
    %239 = vmatpush.bf16.msra.mxu0 %v216
    %240 = vmatmul.bf16.gmra.mxu0 %v166
    %v241 = vpop.f32.mrf.mxu0
    %v242 = vadd.f32 %v183, %v241
    %v243 = vpop.f32.mrf.mxu0
    %244 = vdwg.mxu0
    %v245 = vlaneseq
    %v246 = vshrl.u32 %v245, 7
    %v247 = vadd.s32 %v246, 8
    %v248 = vadd.s32 %v246, 16
    %v249 = vadd.s32 %v246, 24
    %v250 = vadd.s32 %v246, 32
    %v251 = vadd.s32 %v246, 40
    %v252 = vadd.s32 %v246, 48
    %v253 = vadd.s32 %v246, 56
    %v254 = vadd.s32 %v246, 64
    %v255 = vadd.s32 %v246, 72
    %v256 = vadd.s32 %v246, 80
    %v257 = vadd.s32 %v246, 88
    %v258 = vadd.s32 %v246, 96
    %v259 = vadd.s32 %v246, 104
    %v260 = vadd.s32 %v246, 112
    %v261 = vadd.s32 %v246, 120
    %v262 = vlaneseq
    %v263 = vand.u32 %v262, 127
    %vm264 = vcmp.lt.s32.totalorder %v246, 32
    %vm265 = vcmp.lt.s32.totalorder %v247, 32
    %vm266 = vcmp.lt.s32.totalorder %v248, 32
    %vm267 = vcmp.lt.s32.totalorder %v249, 32
    %vm268 = vcmp.lt.s32.totalorder %v250, 32
    %vm269 = vcmp.lt.s32.totalorder %v251, 32
    %vm270 = vcmp.lt.s32.totalorder %v252, 32
    %vm271 = vcmp.lt.s32.totalorder %v253, 32
    %vm272 = vcmp.lt.s32.totalorder %v254, 32
    %vm273 = vcmp.lt.s32.totalorder %v255, 32
    %vm274 = vcmp.lt.s32.totalorder %v256, 32
    %vm275 = vcmp.lt.s32.totalorder %v257, 32
    %vm276 = vcmp.lt.s32.totalorder %v258, 32
    %vm277 = vcmp.lt.s32.totalorder %v259, 32
    %vm278 = vcmp.lt.s32.totalorder %v260, 32
    %vm279 = vcmp.lt.s32.totalorder %v261, 32
    %vm280 = vcmp.lt.s32.totalorder %v263, 32
    %vm281 = vmand %vm264, %vm280
    %vm282 = vmand %vm265, %vm280
    %vm283 = vmand %vm266, %vm280
    %vm284 = vmand %vm267, %vm280
    %vm285 = vmand %vm268, %vm280
    %vm286 = vmand %vm269, %vm280
    %vm287 = vmand %vm270, %vm280
    %vm288 = vmand %vm271, %vm280
    %vm289 = vmand %vm272, %vm280
    %vm290 = vmand %vm273, %vm280
    %vm291 = vmand %vm274, %vm280
    %vm292 = vmand %vm275, %vm280
    %vm293 = vmand %vm276, %vm280
    %vm294 = vmand %vm277, %vm280
    %vm295 = vmand %vm278, %vm280
    %vm296 = vmand %vm279, %vm280
    %vm297 = vcmp.lt.s32.totalorder %v246, 8
    %vm298 = vcmp.lt.s32.totalorder %v247, 8
    %vm299 = vcmp.lt.s32.totalorder %v248, 8
    %vm300 = vcmp.lt.s32.totalorder %v249, 8
    %vm301 = vcmp.lt.s32.totalorder %v250, 8
    %vm302 = vcmp.lt.s32.totalorder %v251, 8
    %vm303 = vcmp.lt.s32.totalorder %v252, 8
    %vm304 = vcmp.lt.s32.totalorder %v253, 8
    %vm305 = vcmp.lt.s32.totalorder %v254, 8
    %vm306 = vcmp.lt.s32.totalorder %v255, 8
    %vm307 = vcmp.lt.s32.totalorder %v256, 8
    %vm308 = vcmp.lt.s32.totalorder %v257, 8
    %vm309 = vcmp.lt.s32.totalorder %v258, 8
    %vm310 = vcmp.lt.s32.totalorder %v259, 8
    %vm311 = vcmp.lt.s32.totalorder %v260, 8
    %vm312 = vcmp.lt.s32.totalorder %v261, 8
    %vm313 = vcmp.lt.s32.totalorder %v263, 8
    %vm314 = vmxor %vm297, %vm313
    %vm315 = vmxor %vm298, %vm313
    %vm316 = vmxor %vm299, %vm313
    %vm317 = vmxor %vm300, %vm313
    %vm318 = vmxor %vm301, %vm313
    %vm319 = vmxor %vm302, %vm313
    %vm320 = vmxor %vm303, %vm313
    %vm321 = vmxor %vm304, %vm313
    %vm322 = vmxor %vm305, %vm313
    %vm323 = vmxor %vm306, %vm313
    %vm324 = vmxor %vm307, %vm313
    %vm325 = vmxor %vm308, %vm313
    %vm326 = vmxor %vm309, %vm313
    %vm327 = vmxor %vm310, %vm313
    %vm328 = vmxor %vm311, %vm313
    %vm329 = vmxor %vm312, %vm313
    %vm330 = vmxor %vm314, 1
    %vm331 = vmxor %vm315, 1
    %vm332 = vmxor %vm316, 1
    %vm333 = vmxor %vm317, 1
    %vm334 = vmxor %vm318, 1
    %vm335 = vmxor %vm319, 1
    %vm336 = vmxor %vm320, 1
    %vm337 = vmxor %vm321, 1
    %vm338 = vmxor %vm322, 1
    %vm339 = vmxor %vm323, 1
    %vm340 = vmxor %vm324, 1
    %vm341 = vmxor %vm325, 1
    %vm342 = vmxor %vm326, 1
    %vm343 = vmxor %vm327, 1
    %vm344 = vmxor %vm328, 1
    %vm345 = vmxor %vm329, 1
    %vm346 = vmand %vm281, %vm330
    %vm347 = vmand %vm282, %vm331
    %vm348 = vmand %vm283, %vm332
    %vm349 = vmand %vm284, %vm333
    %vm350 = vmand %vm285, %vm334
    %vm351 = vmand %vm286, %vm335
    %vm352 = vmand %vm287, %vm336
    %vm353 = vmand %vm288, %vm337
    %vm354 = vmand %vm289, %vm338
    %vm355 = vmand %vm290, %vm339
    %vm356 = vmand %vm291, %vm340
    %vm357 = vmand %vm292, %vm341
    %vm358 = vmand %vm293, %vm342
    %vm359 = vmand %vm294, %vm343
    %vm360 = vmand %vm295, %vm344
    %vm361 = vmand %vm296, %vm345
    %vm362 = vcmp.lt.s32.totalorder %v246, 16
    %vm363 = vcmp.lt.s32.totalorder %v247, 16
    %vm364 = vcmp.lt.s32.totalorder %v248, 16
    %vm365 = vcmp.lt.s32.totalorder %v249, 16
    %vm366 = vcmp.lt.s32.totalorder %v250, 16
    %vm367 = vcmp.lt.s32.totalorder %v251, 16
    %vm368 = vcmp.lt.s32.totalorder %v252, 16
    %vm369 = vcmp.lt.s32.totalorder %v253, 16
    %vm370 = vcmp.lt.s32.totalorder %v254, 16
    %vm371 = vcmp.lt.s32.totalorder %v255, 16
    %vm372 = vcmp.lt.s32.totalorder %v256, 16
    %vm373 = vcmp.lt.s32.totalorder %v257, 16
    %vm374 = vcmp.lt.s32.totalorder %v258, 16
    %vm375 = vcmp.lt.s32.totalorder %v259, 16
    %vm376 = vcmp.lt.s32.totalorder %v260, 16
    %vm377 = vcmp.lt.s32.totalorder %v261, 16
    %vm378 = vcmp.lt.s32.totalorder %v263, 16
    %vm379 = vmxor %vm362, %vm378
    %vm380 = vmxor %vm363, %vm378
    %vm381 = vmxor %vm364, %vm378
    %vm382 = vmxor %vm365, %vm378
    %vm383 = vmxor %vm366, %vm378
    %vm384 = vmxor %vm367, %vm378
    %vm385 = vmxor %vm368, %vm378
    %vm386 = vmxor %vm369, %vm378
    %vm387 = vmxor %vm370, %vm378
    %vm388 = vmxor %vm371, %vm378
    %vm389 = vmxor %vm372, %vm378
    %vm390 = vmxor %vm373, %vm378
    %vm391 = vmxor %vm374, %vm378
    %vm392 = vmxor %vm375, %vm378
    %vm393 = vmxor %vm376, %vm378
    %vm394 = vmxor %vm377, %vm378
    %vm395 = vmxor %vm379, 1
    %vm396 = vmxor %vm380, 1
    %vm397 = vmxor %vm381, 1
    %vm398 = vmxor %vm382, 1
    %vm399 = vmxor %vm383, 1
    %vm400 = vmxor %vm384, 1
    %vm401 = vmxor %vm385, 1
    %vm402 = vmxor %vm386, 1
    %vm403 = vmxor %vm387, 1
    %vm404 = vmxor %vm388, 1
    %vm405 = vmxor %vm389, 1
    %vm406 = vmxor %vm390, 1
    %vm407 = vmxor %vm391, 1
    %vm408 = vmxor %vm392, 1
    %vm409 = vmxor %vm393, 1
    %vm410 = vmxor %vm394, 1
    %vm411 = vmand %vm346, %vm395
    %vm412 = vmand %vm347, %vm396
    %vm413 = vmand %vm348, %vm397
    %vm414 = vmand %vm349, %vm398
    %vm415 = vmand %vm350, %vm399
    %vm416 = vmand %vm351, %vm400
    %vm417 = vmand %vm352, %vm401
    %vm418 = vmand %vm353, %vm402
    %vm419 = vmand %vm354, %vm403
    %vm420 = vmand %vm355, %vm404
    %vm421 = vmand %vm356, %vm405
    %vm422 = vmand %vm357, %vm406
    %vm423 = vmand %vm358, %vm407
    %vm424 = vmand %vm359, %vm408
    %vm425 = vmand %vm360, %vm409
    %vm426 = vmand %vm361, %vm410
    %vm427 = vcmp.lt.s32.totalorder %v246, 24
    %vm428 = vcmp.lt.s32.totalorder %v247, 24
    %vm429 = vcmp.lt.s32.totalorder %v248, 24
    %vm430 = vcmp.lt.s32.totalorder %v249, 24
    %vm431 = vcmp.lt.s32.totalorder %v250, 24
    %vm432 = vcmp.lt.s32.totalorder %v251, 24
    %vm433 = vcmp.lt.s32.totalorder %v252, 24
    %vm434 = vcmp.lt.s32.totalorder %v253, 24
    %vm435 = vcmp.lt.s32.totalorder %v254, 24
    %vm436 = vcmp.lt.s32.totalorder %v255, 24
    %vm437 = vcmp.lt.s32.totalorder %v256, 24
    %vm438 = vcmp.lt.s32.totalorder %v257, 24
    %vm439 = vcmp.lt.s32.totalorder %v258, 24
    %vm440 = vcmp.lt.s32.totalorder %v259, 24
    %vm441 = vcmp.lt.s32.totalorder %v260, 24
    %vm442 = vcmp.lt.s32.totalorder %v261, 24
    %vm443 = vcmp.lt.s32.totalorder %v263, 24
    %vm444 = vmxor %vm427, %vm443
    %vm445 = vmxor %vm428, %vm443
    %vm446 = vmxor %vm429, %vm443
    %vm447 = vmxor %vm430, %vm443
    %vm448 = vmxor %vm431, %vm443
    %vm449 = vmxor %vm432, %vm443
    %vm450 = vmxor %vm433, %vm443
    %vm451 = vmxor %vm434, %vm443
    %vm452 = vmxor %vm435, %vm443
    %vm453 = vmxor %vm436, %vm443
    %vm454 = vmxor %vm437, %vm443
    %vm455 = vmxor %vm438, %vm443
    %vm456 = vmxor %vm439, %vm443
    %vm457 = vmxor %vm440, %vm443
    %vm458 = vmxor %vm441, %vm443
    %vm459 = vmxor %vm442, %vm443
    %vm460 = vmxor %vm444, 1
    %vm461 = vmxor %vm445, 1
    %vm462 = vmxor %vm446, 1
    %vm463 = vmxor %vm447, 1
    %vm464 = vmxor %vm448, 1
    %vm465 = vmxor %vm449, 1
    %vm466 = vmxor %vm450, 1
    %vm467 = vmxor %vm451, 1
    %vm468 = vmxor %vm452, 1
    %vm469 = vmxor %vm453, 1
    %vm470 = vmxor %vm454, 1
    %vm471 = vmxor %vm455, 1
    %vm472 = vmxor %vm456, 1
    %vm473 = vmxor %vm457, 1
    %vm474 = vmxor %vm458, 1
    %vm475 = vmxor %vm459, 1
    %vm476 = vmand %vm411, %vm460
    %vm477 = vmand %vm412, %vm461
    %vm478 = vmand %vm413, %vm462
    %vm479 = vmand %vm414, %vm463
    %vm480 = vmand %vm415, %vm464
    %vm481 = vmand %vm416, %vm465
    %vm482 = vmand %vm417, %vm466
    %vm483 = vmand %vm418, %vm467
    %vm484 = vmand %vm419, %vm468
    %vm485 = vmand %vm420, %vm469
    %vm486 = vmand %vm421, %vm470
    %vm487 = vmand %vm422, %vm471
    %vm488 = vmand %vm423, %vm472
    %vm489 = vmand %vm424, %vm473
    %vm490 = vmand %vm425, %vm474
    %vm491 = vmand %vm426, %vm475
    %v492 = vsel %vm476, 1, 0
    %v493 = vsel %vm477, 1, 0
    %v494 = vsel %vm478, 1, 0
    %v495 = vsel %vm479, 1, 0
    %v496 = vsel %vm480, 1, 0
    %v497 = vsel %vm481, 1, 0
    %v498 = vsel %vm482, 1, 0
    %v499 = vsel %vm483, 1, 0
    %v500 = vsel %vm484, 1, 0
    %v501 = vsel %vm485, 1, 0
    %v502 = vsel %vm486, 1, 0
    %v503 = vsel %vm487, 1, 0
    %v504 = vsel %vm488, 1, 0
    %v505 = vsel %vm489, 1, 0
    %v506 = vsel %vm490, 1, 0
    %v507 = vsel %vm491, 1, 0
    %v508 = vcvt.s32.f32 %v492
    %v509 = vcvt.s32.f32 %v493
    %v510 = vcvt.s32.f32 %v494
    %v511 = vcvt.s32.f32 %v495
    %v512 = vcvt.s32.f32 %v496
    %v513 = vcvt.s32.f32 %v497
    %v514 = vcvt.s32.f32 %v498
    %v515 = vcvt.s32.f32 %v499
    %v516 = vcvt.s32.f32 %v500
    %v517 = vcvt.s32.f32 %v501
    %v518 = vcvt.s32.f32 %v502
    %v519 = vcvt.s32.f32 %v503
    %v520 = vcvt.s32.f32 %v504
    %v521 = vcvt.s32.f32 %v505
    %v522 = vcvt.s32.f32 %v506
    %v523 = vcvt.s32.f32 %v507
    %v524 = vpack.c.bf16 %v509, %v508
    %v525 = vpack.c.bf16 %v511, %v510
    %v526 = vpack.c.bf16 %v513, %v512
    %v527 = vpack.c.bf16 %v515, %v514
    %v528 = vpack.c.bf16 %v517, %v516
    %v529 = vpack.c.bf16 %v519, %v518
    %v530 = vpack.c.bf16 %v521, %v520
    %v531 = vpack.c.bf16 %v523, %v522
    %v532 = vld [vmem:[%s7] sm:$0x1]
    %v534 = vperm.slane %v532, 0
    %v536 = vmul.f32 %v125, %v534
    %v537 = vpack.c.bf16 %v536, %v536
    %538 = vmatpush.bf16.msra.mxu0 %v531
    %539 = vmatpush.bf16.msra.mxu0 %v530
    %540 = vmatpush.bf16.msra.mxu0 %v529
    %541 = vmatpush.bf16.msra.mxu0 %v528
    %542 = vmatpush.bf16.msra.mxu0 %v527
    %543 = vmatpush.bf16.msra.mxu0 %v526
    %544 = vmatpush.bf16.msra.mxu0 %v525
    %545 = vmatpush.bf16.msra.mxu0 %v524
    %546 = vmatmul.bf16.gmra.mxu0 %v537
    %v547 = vpop.f32.mrf.mxu0
    %v548 = vadd.f32 8.0, %v547
    %v549 = vpop.f32.mrf.mxu0
    %550 = vdwg.mxu0
    %v551 = vrcp.pop %v548
    %v552 = vmul.f32 %v242, %v551
    %553 = vst [vmem:[%s8] sm:$0xff] %v552
    // Predicated region
    $region50: #{trans_conv_forward.3} parent=1 // pred_check
      _
    $region51: #{trans_conv_forward.3} parent=1 // pred_check_branch
      %555 = sbr.rel (0) target = $region53
    $region52: #{trans_conv_forward.3} parent=1 // pred_region
      _
    $region53: #{trans_conv_forward.3} parent=1 // pred_fallthru
      _
    // Predicated region
    $region54: #{trans_conv_forward.3} parent=1 // pred_check
      _
    $region55: #{trans_conv_forward.3} parent=1 // pred_check_branch
      %557 = sbr.rel (0) target = $region57
    $region56: #{trans_conv_forward.3} parent=1 // pred_region
      _
    $region57: #{trans_conv_forward.3} parent=1 // pred_fallthru
      _
    %558 = vsyncpa [#allocation3], 1
    %559 = vsyncpa [#allocation5], 1
    %560 = vsyncpa [#allocation8], 1

// kernel: trans_conv_forward.2
$region0: #{trans_conv_forward.2}
  #allocation0 [shape = 'u32[]', space=smem, size = 0x4, offset = 0x4, fixed_abs, tag = 'smem constant byte address 0x4 - core index']
  #allocation1 [shape = 'u32[72,128]{1,0:T(1,128)}', space=vmem, size = 0x9000, scoped, tag = 'internal scratch']
  #allocation2 [shape = 'f32[128,128]{1,0:T(8,128)}', space=vmem, size = 0x10000, scoped, tag = 'scratch operand']
  #allocation3 [shape = 'f32[1,1]{1,0:T(1,128)}', space=vmem, size = 0x200, scoped, tag = 'scratch operand']
  #allocation4 [shape = 'f32[1,1]{1,0:T(1,128)}', space=vmem, size = 0x200, scoped, tag = 'scratch operand']
  %s0 = inlined_call_operand.hbm [shape: f32[8,32], index: 0, kind: input, shape index: {}]
  %s1 = inlined_call_operand.hbm [shape: f32[8,32], index: 1, kind: input, shape index: {}]
  %s2 = inlined_call_operand.hbm [shape: bf16[32,128], index: 2, kind: input, shape index: {}]
  %s3 = inlined_call_operand.hbm [shape: bf16[32,256], index: 3, kind: input, shape index: {}]
  %s4 = inlined_call_operand.vmem [shape: f32[1,128], index: 4, kind: input, shape index: {}]
  %s5 = inlined_call_operand.hbm [shape: f32[1,256], index: 5, kind: input, shape index: {}]
  %s6 = inlined_call_operand.vmem [shape: bf16[128,128], index: 6, kind: output, shape index: {0}]
  %s7 = inlined_call_operand.vmem [shape: f32[1,128], index: 7, kind: output, shape index: {1}]
  %8 = xla_tuple %s6, %s7
  %s9 = sld [smem:[#allocation0]]
  $region70: #{trans_conv_forward.2} parent=0
    _
  %s11 = ssub.s32 1, %s9
  %s12 = scalar_select 0, %s11, %s9
  $region1: #{trans_conv_forward.2} parent=0
    #allocation5 [shape = 'u8[4096]{0}', space=vmem, size = 0x1000, scoped, tag = 'input window, operand 0, single buffered']
    #allocation6 [shape = 's32[1]{0}', space=sflag, size = 0x4, scoped, tag = 'scoped memory for trans_conv_forward.2']
    #allocation7 [shape = 'u8[4096]{0}', space=vmem, size = 0x1000, scoped, tag = 'input window, operand 1, single buffered']
    #allocation8 [shape = 's32[1]{0}', space=sflag, size = 0x4, scoped, tag = 'scoped memory for trans_conv_forward.2']
    #allocation9 [shape = 'u8[8192]{0}', space=vmem, size = 0x2000, scoped, tag = 'input window, operand 2, single buffered']
    #allocation10 [shape = 'u8[16384]{0}', space=vmem, size = 0x4000, scoped, tag = 'input window, operand 3, single buffered']
    #allocation11 [shape = 's32[1]{0}', space=sflag, size = 0x4, scoped, tag = 'scoped memory for trans_conv_forward.2']
    #allocation12 [shape = 'u8[1024]{0}', space=vmem, size = 0x400, scoped, tag = 'input window, operand 5, single buffered']
    %13 = vsyncpa [#allocation6], 0
    %14 = vsyncpa [#allocation8], 0
    %15 = vsyncpa [#allocation11], 0
    // Predicated region
    $region2: #{trans_conv_forward.2} parent=1 // pred_check
      _
    $region3: #{trans_conv_forward.2} parent=1 // pred_check_branch
      %17 = sbr.rel (0) target = $region5
    $region4: #{trans_conv_forward.2} parent=1 // pred_region
      %19 = vsyncadd [#allocation6], 0
      %s21 = sshll.u32 %s0, 4
      %s22 = int_to_ptr.hbm [resolvable:$true] %s21
      %s23 = sshll.u32 [#allocation5], 4
      %s24 = int_to_ptr.vmem [resolvable:$true] %s23
      %26 = dma.hbm_to_vmem [thread:$0]  %s22, 128, %s24, [#allocation6]
    $region5: #{trans_conv_forward.2} parent=1 // pred_fallthru
      _
    // Predicated region
    $region6: #{trans_conv_forward.2} parent=1 // pred_check
      _
    $region7: #{trans_conv_forward.2} parent=1 // pred_check_branch
      %28 = sbr.rel (0) target = $region9
    $region8: #{trans_conv_forward.2} parent=1 // pred_region
      %30 = vsyncadd [#allocation8], 0
      %s32 = sshll.u32 %s1, 4
      %s33 = int_to_ptr.hbm [resolvable:$true] %s32
      %s34 = sshll.u32 [#allocation7], 4
      %s35 = int_to_ptr.vmem [resolvable:$true] %s34
      %37 = dma.hbm_to_vmem [thread:$0]  %s33, 128, %s35, [#allocation8]
    $region9: #{trans_conv_forward.2} parent=1 // pred_fallthru
      _
    // Predicated region
    $region10: #{trans_conv_forward.2} parent=1 // pred_check
      _
    $region11: #{trans_conv_forward.2} parent=1 // pred_check_branch
      %39 = sbr.rel (0) target = $region13
    $region12: #{trans_conv_forward.2} parent=1 // pred_region
      %41 = vsyncadd [#allocation8], 0
      %s42 = sshll.u32 %s2, 4
      %s43 = int_to_ptr.hbm [resolvable:$true] %s42
      %s44 = sshll.u32 [#allocation9], 4
      %s45 = int_to_ptr.vmem [resolvable:$true] %s44
      %50 = dma.hbm_to_vmem [thread:$0]  %s43, 256, %s45, [#allocation8], 64, 64, 4
    $region13: #{trans_conv_forward.2} parent=1 // pred_fallthru
      _
    // Predicated region
    $region14: #{trans_conv_forward.2} parent=1 // pred_check
      _
    $region15: #{trans_conv_forward.2} parent=1 // pred_check_branch
      %52 = sbr.rel (0) target = $region17
    $region16: #{trans_conv_forward.2} parent=1 // pred_region
      %54 = vsyncadd [#allocation11], 0
      %s55 = sshll.u32 %s3, 4
      %s56 = int_to_ptr.hbm [resolvable:$true] %s55
      %s57 = sshll.u32 [#allocation10], 4
      %s58 = int_to_ptr.vmem [resolvable:$true] %s57
      %63 = dma.hbm_to_vmem [thread:$0]  %s56, 512, %s58, [#allocation11], 128, 128, 8
    $region17: #{trans_conv_forward.2} parent=1 // pred_fallthru
      _
    // Predicated region
    $region18: #{trans_conv_forward.2} parent=1 // pred_check
      _
    $region19: #{trans_conv_forward.2} parent=1 // pred_check_branch
      %65 = sbr.rel (0) target = $region21
    $region20: #{trans_conv_forward.2} parent=1 // pred_region
      _
    $region21: #{trans_conv_forward.2} parent=1 // pred_fallthru
      _
    // Predicated region
    $region22: #{trans_conv_forward.2} parent=1 // pred_check
      _
    $region23: #{trans_conv_forward.2} parent=1 // pred_check_branch
      %67 = sbr.rel (0) target = $region25
    $region24: #{trans_conv_forward.2} parent=1 // pred_region
      %69 = vsyncadd [#allocation11], 0
      %s71 = sshll.u32 %s5, 4
      %s72 = int_to_ptr.hbm [resolvable:$true] %s71
      %s73 = sshll.u32 [#allocation12], 4
      %s74 = int_to_ptr.vmem [resolvable:$true] %s73
      %76 = dma.hbm_to_vmem [thread:$0]  %s72, 32, %s74, [#allocation11]
    $region25: #{trans_conv_forward.2} parent=1 // pred_fallthru
      _
    // Predicated region
    $region26: #{trans_conv_forward.2} parent=1 // pred_check
      _
    $region27: #{trans_conv_forward.2} parent=1 // pred_check_branch
      %78 = sbr.rel (0) target = $region29
    $region28: #{trans_conv_forward.2} parent=1 // pred_region
      %80 = dma.done [#allocation6], 128
    $region29: #{trans_conv_forward.2} parent=1 // pred_fallthru
      _
    // Predicated region
    $region30: #{trans_conv_forward.2} parent=1 // pred_check
      _
    $region31: #{trans_conv_forward.2} parent=1 // pred_check_branch
      %82 = sbr.rel (0) target = $region33
    $region32: #{trans_conv_forward.2} parent=1 // pred_region
      %84 = dma.done [#allocation8], 128
    $region33: #{trans_conv_forward.2} parent=1 // pred_fallthru
      _
    // Predicated region
    $region34: #{trans_conv_forward.2} parent=1 // pred_check
      _
    $region35: #{trans_conv_forward.2} parent=1 // pred_check_branch
      %86 = sbr.rel (0) target = $region37
    $region36: #{trans_conv_forward.2} parent=1 // pred_region
      %88 = dma.done [#allocation8], 256
    $region37: #{trans_conv_forward.2} parent=1 // pred_fallthru
      _
    // Predicated region
    $region38: #{trans_conv_forward.2} parent=1 // pred_check
      _
    $region39: #{trans_conv_forward.2} parent=1 // pred_check_branch
      %90 = sbr.rel (0) target = $region41
    $region40: #{trans_conv_forward.2} parent=1 // pred_region
      %92 = dma.done [#allocation11], 512
    $region41: #{trans_conv_forward.2} parent=1 // pred_fallthru
      _
    // Predicated region
    $region42: #{trans_conv_forward.2} parent=1 // pred_check
      _
    $region43: #{trans_conv_forward.2} parent=1 // pred_check_branch
      %94 = sbr.rel (0) target = $region45
    $region44: #{trans_conv_forward.2} parent=1 // pred_region
      %96 = dma.done [#allocation11], 32
    $region45: #{trans_conv_forward.2} parent=1 // pred_fallthru
      _
    %p98 = scmp.eq.s32.totalorder 0, 0
    // Predicated region
    $region46: #{trans_conv_forward.2} parent=1 // pred_check
      %p99 = pneg %p98
    $region47: #{trans_conv_forward.2} parent=1 // pred_check_branch
      %101 = sbr.rel (%p99) target = $region49
    $region48: #{trans_conv_forward.2} parent=1 // pred_region
      %102 = vst [vmem:[#allocation2] sm:$0xff] 0.0
      %103 = vst [vmem:[#allocation2 + $0x8] sm:$0xff] 0.0
      %104 = vst [vmem:[#allocation2 + $0x10] sm:$0xff] 0.0
      %105 = vst [vmem:[#allocation2 + $0x18] sm:$0xff] 0.0
      %106 = vst [vmem:[#allocation2 + $0x20] sm:$0xff] 0.0
      %107 = vst [vmem:[#allocation2 + $0x28] sm:$0xff] 0.0
      %108 = vst [vmem:[#allocation2 + $0x30] sm:$0xff] 0.0
      %109 = vst [vmem:[#allocation2 + $0x38] sm:$0xff] 0.0
      %110 = vst [vmem:[#allocation2 + $0x40] sm:$0xff] 0.0
      %111 = vst [vmem:[#allocation2 + $0x48] sm:$0xff] 0.0
      %112 = vst [vmem:[#allocation2 + $0x50] sm:$0xff] 0.0
      %113 = vst [vmem:[#allocation2 + $0x58] sm:$0xff] 0.0
      %114 = vst [vmem:[#allocation2 + $0x60] sm:$0xff] 0.0
      %115 = vst [vmem:[#allocation2 + $0x68] sm:$0xff] 0.0
      %116 = vst [vmem:[#allocation2 + $0x70] sm:$0xff] 0.0
      %117 = vst [vmem:[#allocation2 + $0x78] sm:$0xff] 0.0
      %vm118 = vcmask 0
      %119 = vst.msk [vmem:[#allocation3] sm:$0x1] %vm118, 0.0
      %120 = vst.msk [vmem:[#allocation4] sm:$0x1] %vm118, 0.0
      %121 = vst [vmem:[%s7] sm:$0x1] 0.0
      %122 = vst [vmem:[%s6] sm:$0xf] 0
      %123 = vst [vmem:[%s6 + $0x4] sm:$0xf] 0
      %124 = vst [vmem:[%s6 + $0x8] sm:$0xf] 0
      %125 = vst [vmem:[%s6 + $0xc] sm:$0xf] 0
      %126 = vst [vmem:[%s6 + $0x10] sm:$0xf] 0
      %127 = vst [vmem:[%s6 + $0x14] sm:$0xf] 0
      %128 = vst [vmem:[%s6 + $0x18] sm:$0xf] 0
      %129 = vst [vmem:[%s6 + $0x1c] sm:$0xf] 0
      %130 = vst [vmem:[%s6 + $0x20] sm:$0xf] 0
      %131 = vst [vmem:[%s6 + $0x24] sm:$0xf] 0
      %132 = vst [vmem:[%s6 + $0x28] sm:$0xf] 0
      %133 = vst [vmem:[%s6 + $0x2c] sm:$0xf] 0
      %134 = vst [vmem:[%s6 + $0x30] sm:$0xf] 0
      %135 = vst [vmem:[%s6 + $0x34] sm:$0xf] 0
      %136 = vst [vmem:[%s6 + $0x38] sm:$0xf] 0
      %137 = vst [vmem:[%s6 + $0x3c] sm:$0xf] 0
    $region49: #{trans_conv_forward.2} parent=1 // pred_fallthru
      _
    %v138 = vld [vmem:[#allocation5] sm:$0xff]
    %v139 = vpack.c.bf16 %v138, %v138
    %v140 = vld [vmem:[#allocation9] sm:$0xf]
    %v141 = vld [vmem:[#allocation9 + $0x4] sm:$0xf]
    %v142 = vld [vmem:[#allocation9 + $0x8] sm:$0xf]
    %v143 = vld [vmem:[#allocation9 + $0xc] sm:$0xf]
    %v144 = vld [vmem:[%s4] sm:$0x1]
    %v146 = vperm.slane %v144, 0
    %v152 = vunpack.c.l.b16 %v140
    %v153 = vunpack.c.l.b16 %v141
    %v154 = vunpack.c.l.b16 %v142
    %v155 = vunpack.c.l.b16 %v143
    %v156 = vpack.c.b16 %v153, %v152
    %v157 = vpack.c.b16 %v155, %v154
    %vm160 = vcmask 261120
    %v162 = vsel %vm160, %v139, 0
    %164 = vmatpush.bf16.msra.mxu0 0
    %165 = vmatpush.bf16.msra.mxu0 0
    %166 = vmatpush.bf16.msra.mxu0 0
    %167 = vmatpush.bf16.msra.mxu0 0
    %168 = vmatpush.bf16.msra.mxu0 0
    %169 = vmatpush.bf16.msra.mxu0 0
    %170 = vmatpush.bf16.msra.mxu0 %v157
    %171 = vmatpush.bf16.msra.mxu0 %v156
    %172 = vmatmul.bf16.gmra.mxu0 %v162
    %v173 = vpop.f32.mrf.mxu0
    %v174 = vadd.f32 %v146, %v173
    %v175 = vpop.f32.mrf.mxu0
    %176 = vdwg.mxu0
    %v177 = vld [vmem:[#allocation7] sm:$0xff]
    %v178 = vpack.c.bf16 %v177, %v177
    %v179 = vld [vmem:[#allocation10] sm:$0xff]
    %v180 = vld [vmem:[#allocation10 + $0x8] sm:$0xff]
    %v181 = vld [vmem:[#allocation10 + $0x10] sm:$0xff]
    %v182 = vld [vmem:[#allocation10 + $0x18] sm:$0xff]
    %v183 = vld [vmem:[#allocation12] sm:$0x3]
    %v185 = vperm.slane %v183, 0
    %v186 = vperm.slane %v183, 1
    %v193 = vunpack.c.l.b16 %v179
    %v194 = vunpack.c.h.b16 %v179
    %v195 = vunpack.c.l.b16 %v180
    %v196 = vunpack.c.h.b16 %v180
    %v197 = vunpack.c.l.b16 %v181
    %v198 = vunpack.c.h.b16 %v181
    %v199 = vunpack.c.l.b16 %v182
    %v200 = vunpack.c.h.b16 %v182
    %v201 = vpack.c.b16 %v195, %v193
    %v202 = vpack.c.b16 %v196, %v194
    %v203 = vpack.c.b16 %v199, %v197
    %v204 = vpack.c.b16 %v200, %v198
    %v210 = vsel %vm160, %v178, 0
    %212 = vmatpush.bf16.msra.mxu0 0
    %213 = vmatpush.bf16.msra.mxu0 0
    %214 = vmatpush.bf16.msra.mxu0 0
    %215 = vmatpush.bf16.msra.mxu0 0
    %216 = vmatpush.bf16.msra.mxu0 0
    %217 = vmatpush.bf16.msra.mxu0 0
    %218 = vmatpush.bf16.msra.mxu0 %v203
    %219 = vmatpush.bf16.msra.mxu0 %v201
    %220 = vmatmul.bf16.gmra.mxu0 %v210
    %v221 = vpop.f32.mrf.mxu0
    %v222 = vadd.f32 %v185, %v221
    %v223 = vpop.f32.mrf.mxu0
    %224 = vdwg.mxu0
    %225 = vmatpush.bf16.msra.mxu0 0
    %226 = vmatpush.bf16.msra.mxu0 0
    %227 = vmatpush.bf16.msra.mxu0 0
    %228 = vmatpush.bf16.msra.mxu0 0
    %229 = vmatpush.bf16.msra.mxu0 0
    %230 = vmatpush.bf16.msra.mxu0 0
    %231 = vmatpush.bf16.msra.mxu0 %v204
    %232 = vmatpush.bf16.msra.mxu0 %v202
    %233 = vmatmul.bf16.gmra.mxu0 %v210
    %v234 = vpop.f32.mrf.mxu0
    %v235 = vadd.f32 %v186, %v234
    %v236 = vpop.f32.mrf.mxu0
    %237 = vdwg.mxu0
    %v238 = vld [vmem:[#allocation3] sm:$0x1]
    %v239 = vmul.f32 %v174, %v174
    %240 = vadd.xlane.f32.xlu0 %v239
    %v241 = vpop.xlane.xlu0 %240
    %v242 = vrot.slane %v241, 4
    %v243 = vadd.f32 %v241, %v242
    %v244 = vrot.slane %v243, 2
    %v245 = vadd.f32 %v243, %v244
    %v246 = vrot.slane %v245, 1
    %v247 = vadd.f32 %v245, %v246
    %s248 = vtos %v247
    %v249 = vstv %s248
    %v250 = vadd.f32 %v238, %v249
    %vm251 = vcmask 0
    %252 = vst.msk [vmem:[#allocation3] sm:$0x1] %vm251, %v250
    %v253 = vld [vmem:[#allocation4] sm:$0x1]
    %v254 = vmul.f32 %v222, %v222
    %255 = vadd.xlane.f32.xlu0 %v254
    %v256 = vpop.xlane.xlu0 %255
    %v257 = vrot.slane %v256, 4
    %v258 = vadd.f32 %v256, %v257
    %v259 = vrot.slane %v258, 2
    %v260 = vadd.f32 %v258, %v259
    %v261 = vrot.slane %v260, 1
    %v262 = vadd.f32 %v260, %v261
    %s263 = vtos %v262
    %v264 = vstv %s263
    %v265 = vadd.f32 %v253, %v264
    %266 = vst.msk [vmem:[#allocation4] sm:$0x1] %vm251, %v265
    %v267 = vld [vmem:[%s7] sm:$0x1]
    %v268 = vrot.slane %v222, 4
    %v269 = vadd.f32 %v222, %v268
    %v270 = vrot.slane %v269, 2
    %v271 = vadd.f32 %v269, %v270
    %v272 = vrot.slane %v271, 1
    %v273 = vadd.f32 %v271, %v272
    %v274 = vadd.f32 %v267, %v273
    %275 = vst [vmem:[%s7] sm:$0x1] %v274
    %v276 = vld [vmem:[#allocation2] sm:$0xff]
    %v277 = vld [vmem:[#allocation2 + $0x8] sm:$0xff]
    %v278 = vld [vmem:[#allocation2 + $0x10] sm:$0xff]
    %v279 = vld [vmem:[#allocation2 + $0x18] sm:$0xff]
    %v280 = vld [vmem:[#allocation2 + $0x20] sm:$0xff]
    %v281 = vld [vmem:[#allocation2 + $0x28] sm:$0xff]
    %v282 = vld [vmem:[#allocation2 + $0x30] sm:$0xff]
    %v283 = vld [vmem:[#allocation2 + $0x38] sm:$0xff]
    %v284 = vld [vmem:[#allocation2 + $0x40] sm:$0xff]
    %v285 = vld [vmem:[#allocation2 + $0x48] sm:$0xff]
    %v286 = vld [vmem:[#allocation2 + $0x50] sm:$0xff]
    %v287 = vld [vmem:[#allocation2 + $0x58] sm:$0xff]
    %v288 = vld [vmem:[#allocation2 + $0x60] sm:$0xff]
    %v289 = vld [vmem:[#allocation2 + $0x68] sm:$0xff]
    %v290 = vld [vmem:[#allocation2 + $0x70] sm:$0xff]
    %v291 = vld [vmem:[#allocation2 + $0x78] sm:$0xff]
    %v292 = vpack.c.bf16 %v222, %v222
    %v293 = vpack.c.bf16 %v235, %v235
    %294 = vxpose.xlu0.c.b16.start [1/8] %v292, 128
    %295 = vxpose.xlu0.c.b16.cont [2/8] 0, 128
    %296 = vxpose.xlu0.c.b16.cont [3/8] 0, 128
    %297 = vxpose.xlu0.c.b16.cont [4/8] 0, 128
    %298 = vxpose.xlu0.c.b16.cont [5/8] 0, 128
    %299 = vxpose.xlu0.c.b16.cont [6/8] 0, 128
    %300 = vxpose.xlu0.c.b16.cont [7/8] 0, 128
    %301 = vxpose.xlu0.c.b16.end [8/8] 0, 128
    %v302 = vpop.trf.xlu0
    %v303 = vpop.trf.xlu0
    %v304 = vpop.trf.xlu0
    %v305 = vpop.trf.xlu0
    %v306 = vpop.trf.xlu0
    %v307 = vpop.trf.xlu0
    %v308 = vpop.trf.xlu0
    %v309 = vpop.trf.xlu0
    %vm310 = vcmask 64512
    %v312 = vsel %vm310, %v302, 0
    %v315 = vsel %vm310, %v303, 0
    %v318 = vsel %vm310, %v304, 0
    %v321 = vsel %vm310, %v305, 0
    %v324 = vsel %vm310, %v306, 0
    %v327 = vsel %vm310, %v307, 0
    %v330 = vsel %vm310, %v308, 0
    %v333 = vsel %vm310, %v309, 0
    %vm335 = vcmask 1043456
    %v337 = vsel %vm335, %v293, 0
    %339 = vmatpush.bf16.msra.mxu0 0
    %340 = vmatpush.bf16.msra.mxu0 0
    %341 = vmatpush.bf16.msra.mxu0 0
    %342 = vmatpush.bf16.msra.mxu0 0
    %343 = vmatpush.bf16.msra.mxu0 0
    %344 = vmatpush.bf16.msra.mxu0 0
    %345 = vmatpush.bf16.msra.mxu0 0
    %346 = vmatpush.bf16.msra.mxu0 %v337
    %347 = vmatmul.bf16.gmra.mxu0 %v312
    %v348 = vpop.f32.mrf.mxu0
    %v349 = vadd.f32 0.0, %v348
    %v350 = vpop.f32.mrf.mxu0
    %v351 = vadd.f32 0.0, %v350
    %352 = vmatmul.bf16.gmra.mxu0 %v315
    %v353 = vpop.f32.mrf.mxu0
    %v354 = vadd.f32 0.0, %v353
    %v355 = vpop.f32.mrf.mxu0
    %v356 = vadd.f32 0.0, %v355
    %357 = vmatmul.bf16.gmra.mxu0 %v318
    %v358 = vpop.f32.mrf.mxu0
    %v359 = vadd.f32 0.0, %v358
    %v360 = vpop.f32.mrf.mxu0
    %v361 = vadd.f32 0.0, %v360
    %362 = vmatmul.bf16.gmra.mxu0 %v321
    %v363 = vpop.f32.mrf.mxu0
    %v364 = vadd.f32 0.0, %v363
    %v365 = vpop.f32.mrf.mxu0
    %v366 = vadd.f32 0.0, %v365
    %367 = vmatmul.bf16.gmra.mxu0 %v324
    %v368 = vpop.f32.mrf.mxu0
    %v369 = vadd.f32 0.0, %v368
    %v370 = vpop.f32.mrf.mxu0
    %v371 = vadd.f32 0.0, %v370
    %372 = vmatmul.bf16.gmra.mxu0 %v327
    %v373 = vpop.f32.mrf.mxu0
    %v374 = vadd.f32 0.0, %v373
    %v375 = vpop.f32.mrf.mxu0
    %v376 = vadd.f32 0.0, %v375
    %377 = vmatmul.bf16.gmra.mxu0 %v330
    %v378 = vpop.f32.mrf.mxu0
    %v379 = vadd.f32 0.0, %v378
    %v380 = vpop.f32.mrf.mxu0
    %v381 = vadd.f32 0.0, %v380
    %382 = vmatmul.bf16.gmra.mxu0 %v333
    %v383 = vpop.f32.mrf.mxu0
    %v384 = vadd.f32 0.0, %v383
    %v385 = vpop.f32.mrf.mxu0
    %v386 = vadd.f32 0.0, %v385
    %387 = vdwg.mxu0
    %v388 = vadd.f32 %v276, %v349
    %v389 = vadd.f32 %v277, %v351
    %v390 = vadd.f32 %v278, %v354
    %v391 = vadd.f32 %v279, %v356
    %v392 = vadd.f32 %v280, %v359
    %v393 = vadd.f32 %v281, %v361
    %v394 = vadd.f32 %v282, %v364
    %v395 = vadd.f32 %v283, %v366
    %v396 = vadd.f32 %v284, %v369
    %v397 = vadd.f32 %v285, %v371
    %v398 = vadd.f32 %v286, %v374
    %v399 = vadd.f32 %v287, %v376
    %v400 = vadd.f32 %v288, %v379
    %v401 = vadd.f32 %v289, %v381
    %v402 = vadd.f32 %v290, %v384
    %v403 = vadd.f32 %v291, %v386
    %404 = vst [vmem:[#allocation2] sm:$0xff] %v388
    %405 = vst [vmem:[#allocation2 + $0x8] sm:$0xff] %v389
    %406 = vst [vmem:[#allocation2 + $0x10] sm:$0xff] %v390
    %407 = vst [vmem:[#allocation2 + $0x18] sm:$0xff] %v391
    %408 = vst [vmem:[#allocation2 + $0x20] sm:$0xff] %v392
    %409 = vst [vmem:[#allocation2 + $0x28] sm:$0xff] %v393
    %410 = vst [vmem:[#allocation2 + $0x30] sm:$0xff] %v394
    %411 = vst [vmem:[#allocation2 + $0x38] sm:$0xff] %v395
    %412 = vst [vmem:[#allocation2 + $0x40] sm:$0xff] %v396
    %413 = vst [vmem:[#allocation2 + $0x48] sm:$0xff] %v397
    %414 = vst [vmem:[#allocation2 + $0x50] sm:$0xff] %v398
    %415 = vst [vmem:[#allocation2 + $0x58] sm:$0xff] %v399
    %416 = vst [vmem:[#allocation2 + $0x60] sm:$0xff] %v400
    %417 = vst [vmem:[#allocation2 + $0x68] sm:$0xff] %v401
    %418 = vst [vmem:[#allocation2 + $0x70] sm:$0xff] %v402
    %419 = vst [vmem:[#allocation2 + $0x78] sm:$0xff] %v403
    // Predicated region
    $region50: #{trans_conv_forward.2} parent=1 // pred_check
      %p420 = pneg %p98
    $region51: #{trans_conv_forward.2} parent=1 // pred_check_branch
      %422 = sbr.rel (%p420) target = $region53
    $region52: #{trans_conv_forward.2} parent=1 // pred_region
      %v423 = vld [vmem:[#allocation3] sm:$0x1]
      %v424 = vrsqrt.pop %v423
      %v425 = vmul.f32 %v424, %v423
      %v426 = vmul.f32 %v425, %v424
      %v427 = vmul.f32 0.5, %v426
      %v428 = vsub.f32 1.5, %v427
      %v429 = vmul.f32 %v424, %v428
      %vm430 = vweird.f32 %v423
      %vm431 = vweird.f32 %v424
      %vm432 = vmor %vm430, %vm431
      %v433 = vsel %vm432, %v424, %v429
      %v434 = vld [vmem:[#allocation4] sm:$0x1]
      %v435 = vrsqrt.pop %v434
      %v436 = vmul.f32 %v435, %v434
      %v437 = vmul.f32 %v436, %v435
      %v438 = vmul.f32 0.5, %v437
      %v439 = vsub.f32 1.5, %v438
      %v440 = vmul.f32 %v435, %v439
      %vm441 = vweird.f32 %v434
      %vm442 = vweird.f32 %v435
      %vm443 = vmor %vm441, %vm442
      %v444 = vsel %vm443, %v435, %v440
      %v445 = vmul.f32 %v433, %v444
      %v446 = vlaneseq
      %v447 = vshrl.u32 %v446, 7
      %v448 = vadd.s32 %v447, 8
      %v449 = vadd.s32 %v447, 16
      %v450 = vadd.s32 %v447, 24
      %v451 = vadd.s32 %v447, 32
      %v452 = vadd.s32 %v447, 40
      %v453 = vadd.s32 %v447, 48
      %v454 = vadd.s32 %v447, 56
      %v455 = vadd.s32 %v447, 64
      %v456 = vadd.s32 %v447, 72
      %v457 = vadd.s32 %v447, 80
      %v458 = vadd.s32 %v447, 88
      %v459 = vadd.s32 %v447, 96
      %v460 = vadd.s32 %v447, 104
      %v461 = vadd.s32 %v447, 112
      %v462 = vadd.s32 %v447, 120
      %v463 = vlaneseq
      %v464 = vand.u32 %v463, 127
      %vm465 = vcmp.lt.s32.totalorder %v447, 32
      %vm466 = vcmp.lt.s32.totalorder %v448, 32
      %vm467 = vcmp.lt.s32.totalorder %v449, 32
      %vm468 = vcmp.lt.s32.totalorder %v450, 32
      %vm469 = vcmp.lt.s32.totalorder %v451, 32
      %vm470 = vcmp.lt.s32.totalorder %v452, 32
      %vm471 = vcmp.lt.s32.totalorder %v453, 32
      %vm472 = vcmp.lt.s32.totalorder %v454, 32
      %vm473 = vcmp.lt.s32.totalorder %v455, 32
      %vm474 = vcmp.lt.s32.totalorder %v456, 32
      %vm475 = vcmp.lt.s32.totalorder %v457, 32
      %vm476 = vcmp.lt.s32.totalorder %v458, 32
      %vm477 = vcmp.lt.s32.totalorder %v459, 32
      %vm478 = vcmp.lt.s32.totalorder %v460, 32
      %vm479 = vcmp.lt.s32.totalorder %v461, 32
      %vm480 = vcmp.lt.s32.totalorder %v462, 32
      %vm481 = vcmp.lt.s32.totalorder %v464, 32
      %vm482 = vmand %vm465, %vm481
      %vm483 = vmand %vm466, %vm481
      %vm484 = vmand %vm467, %vm481
      %vm485 = vmand %vm468, %vm481
      %vm486 = vmand %vm469, %vm481
      %vm487 = vmand %vm470, %vm481
      %vm488 = vmand %vm471, %vm481
      %vm489 = vmand %vm472, %vm481
      %vm490 = vmand %vm473, %vm481
      %vm491 = vmand %vm474, %vm481
      %vm492 = vmand %vm475, %vm481
      %vm493 = vmand %vm476, %vm481
      %vm494 = vmand %vm477, %vm481
      %vm495 = vmand %vm478, %vm481
      %vm496 = vmand %vm479, %vm481
      %vm497 = vmand %vm480, %vm481
      %vm498 = vcmp.lt.s32.totalorder %v447, 8
      %vm499 = vcmp.lt.s32.totalorder %v448, 8
      %vm500 = vcmp.lt.s32.totalorder %v449, 8
      %vm501 = vcmp.lt.s32.totalorder %v450, 8
      %vm502 = vcmp.lt.s32.totalorder %v451, 8
      %vm503 = vcmp.lt.s32.totalorder %v452, 8
      %vm504 = vcmp.lt.s32.totalorder %v453, 8
      %vm505 = vcmp.lt.s32.totalorder %v454, 8
      %vm506 = vcmp.lt.s32.totalorder %v455, 8
      %vm507 = vcmp.lt.s32.totalorder %v456, 8
      %vm508 = vcmp.lt.s32.totalorder %v457, 8
      %vm509 = vcmp.lt.s32.totalorder %v458, 8
      %vm510 = vcmp.lt.s32.totalorder %v459, 8
      %vm511 = vcmp.lt.s32.totalorder %v460, 8
      %vm512 = vcmp.lt.s32.totalorder %v461, 8
      %vm513 = vcmp.lt.s32.totalorder %v462, 8
      %vm514 = vcmp.lt.s32.totalorder %v464, 8
      %vm515 = vmxor %vm498, %vm514
      %vm516 = vmxor %vm499, %vm514
      %vm517 = vmxor %vm500, %vm514
      %vm518 = vmxor %vm501, %vm514
      %vm519 = vmxor %vm502, %vm514
      %vm520 = vmxor %vm503, %vm514
      %vm521 = vmxor %vm504, %vm514
      %vm522 = vmxor %vm505, %vm514
      %vm523 = vmxor %vm506, %vm514
      %vm524 = vmxor %vm507, %vm514
      %vm525 = vmxor %vm508, %vm514
      %vm526 = vmxor %vm509, %vm514
      %vm527 = vmxor %vm510, %vm514
      %vm528 = vmxor %vm511, %vm514
      %vm529 = vmxor %vm512, %vm514
      %vm530 = vmxor %vm513, %vm514
      %vm531 = vmxor %vm515, 1
      %vm532 = vmxor %vm516, 1
      %vm533 = vmxor %vm517, 1
      %vm534 = vmxor %vm518, 1
      %vm535 = vmxor %vm519, 1
      %vm536 = vmxor %vm520, 1
      %vm537 = vmxor %vm521, 1
      %vm538 = vmxor %vm522, 1
      %vm539 = vmxor %vm523, 1
      %vm540 = vmxor %vm524, 1
      %vm541 = vmxor %vm525, 1
      %vm542 = vmxor %vm526, 1
      %vm543 = vmxor %vm527, 1
      %vm544 = vmxor %vm528, 1
      %vm545 = vmxor %vm529, 1
      %vm546 = vmxor %vm530, 1
      %vm547 = vmand %vm482, %vm531
      %vm548 = vmand %vm483, %vm532
      %vm549 = vmand %vm484, %vm533
      %vm550 = vmand %vm485, %vm534
      %vm551 = vmand %vm486, %vm535
      %vm552 = vmand %vm487, %vm536
      %vm553 = vmand %vm488, %vm537
      %vm554 = vmand %vm489, %vm538
      %vm555 = vmand %vm490, %vm539
      %vm556 = vmand %vm491, %vm540
      %vm557 = vmand %vm492, %vm541
      %vm558 = vmand %vm493, %vm542
      %vm559 = vmand %vm494, %vm543
      %vm560 = vmand %vm495, %vm544
      %vm561 = vmand %vm496, %vm545
      %vm562 = vmand %vm497, %vm546
      %vm563 = vcmp.lt.s32.totalorder %v447, 16
      %vm564 = vcmp.lt.s32.totalorder %v448, 16
      %vm565 = vcmp.lt.s32.totalorder %v449, 16
      %vm566 = vcmp.lt.s32.totalorder %v450, 16
      %vm567 = vcmp.lt.s32.totalorder %v451, 16
      %vm568 = vcmp.lt.s32.totalorder %v452, 16
      %vm569 = vcmp.lt.s32.totalorder %v453, 16
      %vm570 = vcmp.lt.s32.totalorder %v454, 16
      %vm571 = vcmp.lt.s32.totalorder %v455, 16
      %vm572 = vcmp.lt.s32.totalorder %v456, 16
      %vm573 = vcmp.lt.s32.totalorder %v457, 16
      %vm574 = vcmp.lt.s32.totalorder %v458, 16
      %vm575 = vcmp.lt.s32.totalorder %v459, 16
      %vm576 = vcmp.lt.s32.totalorder %v460, 16
      %vm577 = vcmp.lt.s32.totalorder %v461, 16
      %vm578 = vcmp.lt.s32.totalorder %v462, 16
      %vm579 = vcmp.lt.s32.totalorder %v464, 16
      %vm580 = vmxor %vm563, %vm579
      %vm581 = vmxor %vm564, %vm579
      %vm582 = vmxor %vm565, %vm579
      %vm583 = vmxor %vm566, %vm579
      %vm584 = vmxor %vm567, %vm579
      %vm585 = vmxor %vm568, %vm579
      %vm586 = vmxor %vm569, %vm579
      %vm587 = vmxor %vm570, %vm579
      %vm588 = vmxor %vm571, %vm579
      %vm589 = vmxor %vm572, %vm579
      %vm590 = vmxor %vm573, %vm579
      %vm591 = vmxor %vm574, %vm579
      %vm592 = vmxor %vm575, %vm579
      %vm593 = vmxor %vm576, %vm579
      %vm594 = vmxor %vm577, %vm579
      %vm595 = vmxor %vm578, %vm579
      %vm596 = vmxor %vm580, 1
      %vm597 = vmxor %vm581, 1
      %vm598 = vmxor %vm582, 1
      %vm599 = vmxor %vm583, 1
      %vm600 = vmxor %vm584, 1
      %vm601 = vmxor %vm585, 1
      %vm602 = vmxor %vm586, 1
      %vm603 = vmxor %vm587, 1
      %vm604 = vmxor %vm588, 1
      %vm605 = vmxor %vm589, 1
      %vm606 = vmxor %vm590, 1
      %vm607 = vmxor %vm591, 1
      %vm608 = vmxor %vm592, 1
      %vm609 = vmxor %vm593, 1
      %vm610 = vmxor %vm594, 1
      %vm611 = vmxor %vm595, 1
      %vm612 = vmand %vm547, %vm596
      %vm613 = vmand %vm548, %vm597
      %vm614 = vmand %vm549, %vm598
      %vm615 = vmand %vm550, %vm599
      %vm616 = vmand %vm551, %vm600
      %vm617 = vmand %vm552, %vm601
      %vm618 = vmand %vm553, %vm602
      %vm619 = vmand %vm554, %vm603
      %vm620 = vmand %vm555, %vm604
      %vm621 = vmand %vm556, %vm605
      %vm622 = vmand %vm557, %vm606
      %vm623 = vmand %vm558, %vm607
      %vm624 = vmand %vm559, %vm608
      %vm625 = vmand %vm560, %vm609
      %vm626 = vmand %vm561, %vm610
      %vm627 = vmand %vm562, %vm611
      %vm628 = vcmp.lt.s32.totalorder %v447, 24
      %vm629 = vcmp.lt.s32.totalorder %v448, 24
      %vm630 = vcmp.lt.s32.totalorder %v449, 24
      %vm631 = vcmp.lt.s32.totalorder %v450, 24
      %vm632 = vcmp.lt.s32.totalorder %v451, 24
      %vm633 = vcmp.lt.s32.totalorder %v452, 24
      %vm634 = vcmp.lt.s32.totalorder %v453, 24
      %vm635 = vcmp.lt.s32.totalorder %v454, 24
      %vm636 = vcmp.lt.s32.totalorder %v455, 24
      %vm637 = vcmp.lt.s32.totalorder %v456, 24
      %vm638 = vcmp.lt.s32.totalorder %v457, 24
      %vm639 = vcmp.lt.s32.totalorder %v458, 24
      %vm640 = vcmp.lt.s32.totalorder %v459, 24
      %vm641 = vcmp.lt.s32.totalorder %v460, 24
      %vm642 = vcmp.lt.s32.totalorder %v461, 24
      %vm643 = vcmp.lt.s32.totalorder %v462, 24
      %vm644 = vcmp.lt.s32.totalorder %v464, 24
      %vm645 = vmxor %vm628, %vm644
      %vm646 = vmxor %vm629, %vm644
      %vm647 = vmxor %vm630, %vm644
      %vm648 = vmxor %vm631, %vm644
      %vm649 = vmxor %vm632, %vm644
      %vm650 = vmxor %vm633, %vm644
      %vm651 = vmxor %vm634, %vm644
      %vm652 = vmxor %vm635, %vm644
      %vm653 = vmxor %vm636, %vm644
      %vm654 = vmxor %vm637, %vm644
      %vm655 = vmxor %vm638, %vm644
      %vm656 = vmxor %vm639, %vm644
      %vm657 = vmxor %vm640, %vm644
      %vm658 = vmxor %vm641, %vm644
      %vm659 = vmxor %vm642, %vm644
      %vm660 = vmxor %vm643, %vm644
      %vm661 = vmxor %vm645, 1
      %vm662 = vmxor %vm646, 1
      %vm663 = vmxor %vm647, 1
      %vm664 = vmxor %vm648, 1
      %vm665 = vmxor %vm649, 1
      %vm666 = vmxor %vm650, 1
      %vm667 = vmxor %vm651, 1
      %vm668 = vmxor %vm652, 1
      %vm669 = vmxor %vm653, 1
      %vm670 = vmxor %vm654, 1
      %vm671 = vmxor %vm655, 1
      %vm672 = vmxor %vm656, 1
      %vm673 = vmxor %vm657, 1
      %vm674 = vmxor %vm658, 1
      %vm675 = vmxor %vm659, 1
      %vm676 = vmxor %vm660, 1
      %vm677 = vmand %vm612, %vm661
      %vm678 = vmand %vm613, %vm662
      %vm679 = vmand %vm614, %vm663
      %vm680 = vmand %vm615, %vm664
      %vm681 = vmand %vm616, %vm665
      %vm682 = vmand %vm617, %vm666
      %vm683 = vmand %vm618, %vm667
      %vm684 = vmand %vm619, %vm668
      %vm685 = vmand %vm620, %vm669
      %vm686 = vmand %vm621, %vm670
      %vm687 = vmand %vm622, %vm671
      %vm688 = vmand %vm623, %vm672
      %vm689 = vmand %vm624, %vm673
      %vm690 = vmand %vm625, %vm674
      %vm691 = vmand %vm626, %vm675
      %vm692 = vmand %vm627, %vm676
      %v693 = vld [vmem:[#allocation2] sm:$0xff]
      %v694 = vld [vmem:[#allocation2 + $0x8] sm:$0xff]
      %v695 = vld [vmem:[#allocation2 + $0x10] sm:$0xff]
      %v696 = vld [vmem:[#allocation2 + $0x18] sm:$0xff]
      %v697 = vld [vmem:[#allocation2 + $0x20] sm:$0xff]
      %v698 = vld [vmem:[#allocation2 + $0x28] sm:$0xff]
      %v699 = vld [vmem:[#allocation2 + $0x30] sm:$0xff]
      %v700 = vld [vmem:[#allocation2 + $0x38] sm:$0xff]
      %v701 = vld [vmem:[#allocation2 + $0x40] sm:$0xff]
      %v702 = vld [vmem:[#allocation2 + $0x48] sm:$0xff]
      %v703 = vld [vmem:[#allocation2 + $0x50] sm:$0xff]
      %v704 = vld [vmem:[#allocation2 + $0x58] sm:$0xff]
      %v705 = vld [vmem:[#allocation2 + $0x60] sm:$0xff]
      %v706 = vld [vmem:[#allocation2 + $0x68] sm:$0xff]
      %v707 = vld [vmem:[#allocation2 + $0x70] sm:$0xff]
      %v708 = vld [vmem:[#allocation2 + $0x78] sm:$0xff]
      %v710 = vperm.slane %v445, 0
      %711 = vset.pattern.permute.xlu0 0
      %712 = vperm.xlu0 %711, %v710
      %v713 = vpop.permute.xlu0 %712
      %v715 = vmul.f32 %v693, %v713
      %v716 = vmul.f32 %v694, %v713
      %v717 = vmul.f32 %v695, %v713
      %v718 = vmul.f32 %v696, %v713
      %v719 = vmul.f32 %v697, %v713
      %v720 = vmul.f32 %v698, %v713
      %v721 = vmul.f32 %v699, %v713
      %v722 = vmul.f32 %v700, %v713
      %v723 = vmul.f32 %v701, %v713
      %v724 = vmul.f32 %v702, %v713
      %v725 = vmul.f32 %v703, %v713
      %v726 = vmul.f32 %v704, %v713
      %v727 = vmul.f32 %v705, %v713
      %v728 = vmul.f32 %v706, %v713
      %v729 = vmul.f32 %v707, %v713
      %v730 = vmul.f32 %v708, %v713
      %v731 = vsel %vm677, %v715, 0.0
      %v732 = vsel %vm678, %v716, 0.0
      %v733 = vsel %vm679, %v717, 0.0
      %v734 = vsel %vm680, %v718, 0.0
      %v735 = vsel %vm681, %v719, 0.0
      %v736 = vsel %vm682, %v720, 0.0
      %v737 = vsel %vm683, %v721, 0.0
      %v738 = vsel %vm684, %v722, 0.0
      %v739 = vsel %vm685, %v723, 0.0
      %v740 = vsel %vm686, %v724, 0.0
      %v741 = vsel %vm687, %v725, 0.0
      %v742 = vsel %vm688, %v726, 0.0
      %v743 = vsel %vm689, %v727, 0.0
      %v744 = vsel %vm690, %v728, 0.0
      %v745 = vsel %vm691, %v729, 0.0
      %v746 = vsel %vm692, %v730, 0.0
      %v747 = vpack.c.bf16 %v731, %v731
      %v748 = vpack.c.bf16 %v732, %v732
      %v749 = vpack.c.bf16 %v733, %v733
      %v750 = vpack.c.bf16 %v734, %v734
      %v751 = vpack.c.bf16 %v735, %v735
      %v752 = vpack.c.bf16 %v736, %v736
      %v753 = vpack.c.bf16 %v737, %v737
      %v754 = vpack.c.bf16 %v738, %v738
      %v755 = vpack.c.bf16 %v739, %v739
      %v756 = vpack.c.bf16 %v740, %v740
      %v757 = vpack.c.bf16 %v741, %v741
      %v758 = vpack.c.bf16 %v742, %v742
      %v759 = vpack.c.bf16 %v743, %v743
      %v760 = vpack.c.bf16 %v744, %v744
      %v761 = vpack.c.bf16 %v745, %v745
      %v762 = vpack.c.bf16 %v746, %v746
      %763 = vst [vmem:[%s6] sm:$0xf] %v747
      %764 = vst [vmem:[%s6 + $0x4] sm:$0xf] %v748
      %765 = vst [vmem:[%s6 + $0x8] sm:$0xf] %v749
      %766 = vst [vmem:[%s6 + $0xc] sm:$0xf] %v750
      %767 = vst [vmem:[%s6 + $0x10] sm:$0xf] %v751
      %768 = vst [vmem:[%s6 + $0x14] sm:$0xf] %v752
      %769 = vst [vmem:[%s6 + $0x18] sm:$0xf] %v753
      %770 = vst [vmem:[%s6 + $0x1c] sm:$0xf] %v754
      %771 = vst [vmem:[%s6 + $0x20] sm:$0xf] %v755
      %772 = vst [vmem:[%s6 + $0x24] sm:$0xf] %v756
      %773 = vst [vmem:[%s6 + $0x28] sm:$0xf] %v757
      %774 = vst [vmem:[%s6 + $0x2c] sm:$0xf] %v758
      %775 = vst [vmem:[%s6 + $0x30] sm:$0xf] %v759
      %776 = vst [vmem:[%s6 + $0x34] sm:$0xf] %v760
      %777 = vst [vmem:[%s6 + $0x38] sm:$0xf] %v761
      %778 = vst [vmem:[%s6 + $0x3c] sm:$0xf] %v762
      %v779 = vld [vmem:[%s7] sm:$0x1]
      %780 = vset.pattern.permute.xlu0 0
      %781 = vperm.xlu0 %780, %v445
      %v782 = vpop.permute.xlu0 %781
      %v784 = vperm.slane %v782, 0
      %v785 = vmul.f32 %v779, %v784
      %786 = vst [vmem:[%s7] sm:$0x1] %v785
    $region53: #{trans_conv_forward.2} parent=1 // pred_fallthru
      _
    // Predicated region
    $region54: #{trans_conv_forward.2} parent=1 // pred_check
      _
    $region55: #{trans_conv_forward.2} parent=1 // pred_check_branch
      %788 = sbr.rel (0) target = $region57
    $region56: #{trans_conv_forward.2} parent=1 // pred_region
      _
    $region57: #{trans_conv_forward.2} parent=1 // pred_fallthru
      _
    // Predicated region
    $region58: #{trans_conv_forward.2} parent=1 // pred_check
      _
    $region59: #{trans_conv_forward.2} parent=1 // pred_check_branch
      %790 = sbr.rel (0) target = $region61
    $region60: #{trans_conv_forward.2} parent=1 // pred_region
      _
    $region61: #{trans_conv_forward.2} parent=1 // pred_fallthru
      _
    // Predicated region
    $region62: #{trans_conv_forward.2} parent=1 // pred_check
      _
    $region63: #{trans_conv_forward.2} parent=1 // pred_check_branch
      %792 = sbr.rel (0) target = $region65
    $region64: #{trans_conv_forward.2} parent=1 // pred_region
      _
    $region65: #{trans_conv_forward.2} parent=1 // pred_fallthru
      _
    // Predicated region
    $region66: #{trans_conv_forward.2} parent=1 // pred_check
      _
    $region67: #{trans_conv_forward.2} parent=1 // pred_check_branch
      %794 = sbr.rel (0) target = $region69
    $region68: #{trans_conv_forward.2} parent=1 // pred_region
      _
    $region69: #{trans_conv_forward.2} parent=1 // pred_fallthru
      _
    %795 = vsyncpa [#allocation6], 1
    %796 = vsyncpa [#allocation8], 1
    %797 = vsyncpa [#allocation11], 1

</llo_original>
